<compile_context>
chip_gen: v5e
topology: v5e:2x2
jax: 0.10.0
libtpu: 0.0.40
codegen_flags: <defaults>
</compile_context>

<pallas_src>
import math
from functools import partial

import jax
import jax.numpy as jnp
from jax import lax
from jax.experimental import pallas as pl
from jax.experimental.pallas import tpu as pltpu


# ---------------------------------------------------------------------------
# Fused multi-head attention kernel (single program: all batches, all heads)
# ---------------------------------------------------------------------------
def _mha_fused_kernel(q_ref, k_ref, v_ref, w_in_ref, b_in_ref, w_out_ref,
                      b_out_ref, o_ref, *, num_heads):
    # q_ref: (L, N, E), k_ref/v_ref: (S, N, E)  -- native nn.MultiheadAttention layout.
    # w_in_ref: (3E, E) with the Q rows pre-scaled by 1/sqrt(Dh); b_in_ref: (1, 3E)
    # (Q part pre-scaled as well); w_out_ref: (E, E); b_out_ref: (1, E).
    L, N, E = q_ref.shape
    S = k_ref.shape[0]
    H = num_heads
    Dh = E // H

    # Contract x's last dim with the weight's last dim: x @ W.T, no physical transpose.
    cdims = (((1,), (1,)), ((), ()))

    # Load weights once, cast the matmul operands to bf16 once (hoisted out of loops).
    w_in_bf = w_in_ref[...].astype(jnp.bfloat16)     # (3E, E)
    w_q_bf = w_in_bf[0:E, :]
    w_k_bf = w_in_bf[E:2 * E, :]
    w_v_bf = w_in_bf[2 * E:3 * E, :]
    w_out_bf = w_out_ref[...].astype(jnp.bfloat16)   # (E, E)

    b_in = b_in_ref[...]                             # (1, 3E) f32
    b_q = b_in[:, 0:E]
    b_k = b_in[:, E:2 * E]
    b_v = b_in[:, 2 * E:3 * E]
    b_out = b_out_ref[...]                           # (1, E) f32

    # Statically unrolled loop over the (tiny) batch dimension.
    for n in range(N):
        xq = q_ref[:, n, :].astype(jnp.bfloat16)     # (L, E)
        xk = k_ref[:, n, :].astype(jnp.bfloat16)     # (S, E)
        xv = v_ref[:, n, :].astype(jnp.bfloat16)     # (S, E)

        # In-projections: bf16 operands, f32 accumulation.  Scale is folded into w_q/b_q.
        q = lax.dot_general(xq, w_q_bf, cdims,
                            preferred_element_type=jnp.float32) + b_q   # (L, E) f32
        k = lax.dot_general(xk, w_k_bf, cdims,
                            preferred_element_type=jnp.float32) + b_k   # (S, E) f32
        v = lax.dot_general(xv, w_v_bf, cdims,
                            preferred_element_type=jnp.float32) + b_v   # (S, E) f32

        q_bf = q.astype(jnp.bfloat16)
        k_bf = k.astype(jnp.bfloat16)
        v_bf = v.astype(jnp.bfloat16)

        # Per-head attention with the out-projection fused into one f32 accumulator.
        acc = jnp.zeros((L, E), jnp.float32)
        for h in range(H):
            lo = h * Dh
            hi = lo + Dh

            # Scores: contract Dh of q with Dh of k directly (no k.T in-kernel).
            s = lax.dot_general(q_bf[:, lo:hi], k_bf[:, lo:hi], cdims,
                                preferred_element_type=jnp.float32)     # (L, S) f32

            # Softmax entirely in f32; exact normalization (denominator is only (L,1)).
            s = s - jnp.max(s, axis=-1, keepdims=True)
            p = jnp.exp(s)
            p = p / jnp.sum(p, axis=-1, keepdims=True)

            # P @ V_h, then fuse the per-head slice of the out-projection:
            # acc += (p @ v_h) @ W_out[:, lo:hi].T   (all f32 accumulation).
            oh = jnp.dot(p.astype(jnp.bfloat16), v_bf[:, lo:hi],
                         preferred_element_type=jnp.float32)            # (L, Dh) f32
            acc = acc + lax.dot_general(oh.astype(jnp.bfloat16),
                                        w_out_bf[:, lo:hi], cdims,
                                        preferred_element_type=jnp.float32)  # (L, E)

        o_ref[:, n, :] = (acc + b_out).astype(o_ref.dtype)


# ---------------------------------------------------------------------------
# One-time host-side parameter preparation (scale folding + bias reshape)
# ---------------------------------------------------------------------------
def prepare_params(raw, embed_dim, num_heads):
    E = embed_dim
    scale = 1.0 / math.sqrt(E // num_heads)
    w_in = raw["in_proj_weight"]                    # (3E, E), PyTorch layout
    b_in = raw["in_proj_bias"]                      # (3E,)
    # Fold the 1/sqrt(Dh) query scaling into the Q rows of the in-projection.
    w_in = jnp.concatenate([w_in[:E] * scale, w_in[E:]], axis=0)
    b_in = jnp.concatenate([b_in[:E] * scale, b_in[E:]], axis=0)
    return {
        "in_proj_weight": w_in,                               # (3E, E)
        "in_proj_bias": b_in.reshape(1, 3 * E),               # (1, 3E)
        "out_proj_weight": raw["out_proj_weight"],            # (E, E)
        "out_proj_bias": raw["out_proj_bias"].reshape(1, E),  # (1, E)
    }


# ---------------------------------------------------------------------------
# Module forward: a single pallas_call, no wrapper-side data movement
# ---------------------------------------------------------------------------
def cross_attention_forward(prepped, query, key, value, num_heads):
    L, N, E = query.shape
    vmem_spec = lambda: pl.BlockSpec(memory_space=pltpu.MemorySpace.VMEM)

    return pl.pallas_call(
        partial(_mha_fused_kernel, num_heads=num_heads),
        out_shape=jax.ShapeDtypeStruct((L, N, E), jnp.float32),
        in_specs=[vmem_spec() for _ in range(7)],
        out_specs=vmem_spec(),
    )(query, key, value,
      prepped["in_proj_weight"], prepped["in_proj_bias"],
      prepped["out_proj_weight"], prepped["out_proj_bias"])


# ---------------------------------------------------------------------------
# Pure-JAX f32 reference for verification (mirrors nn.MultiheadAttention)
# ---------------------------------------------------------------------------
def reference_forward(params, query, key, value, num_heads):
    L, N, E = query.shape
    S = key.shape[0]
    H = num_heads
    Dh = E // H
    scale = 1.0 / math.sqrt(Dh)

    w_in, b_in = params["in_proj_weight"], params["in_proj_bias"]
    w_out, b_out = params["out_proj_weight"], params["out_proj_bias"]

    q = query.reshape(L * N, E) @ w_in[:E].T + b_in[:E]
    k = key.reshape(S * N, E) @ w_in[E:2 * E].T + b_in[E:2 * E]
    v = value.reshape(S * N, E) @ w_in[2 * E:].T + b_in[2 * E:]

    q = q.reshape(L, N * H, Dh).transpose(1, 0, 2)
    k = k.reshape(S, N * H, Dh).transpose(1, 0, 2)
    v = v.reshape(S, N * H, Dh).transpose(1, 0, 2)

    s = jnp.einsum("bld,bsd->bls", q, k) * scale
    p = jax.nn.softmax(s, axis=-1)
    o = jnp.einsum("bls,bsd->bld", p, v)

    o = o.transpose(1, 0, 2).reshape(L * N, E)
    return (o @ w_out.T + b_out).reshape(L, N, E)


# ---------------------------------------------------------------------------
# Main
# ---------------------------------------------------------------------------
if __name__ == "__main__":
    embed_dim, num_heads = 32, 4
    L, S, N = 8, 8, 2   # target seq len, source seq len, batch

    key0 = jax.random.PRNGKey(0)
    ks = jax.random.split(key0, 8)

    # Deterministic synthetic parameters (shapes match nn.MultiheadAttention).
    params = {
        "in_proj_weight": jax.random.normal(ks[0], (3 * embed_dim, embed_dim),
                                            jnp.float32) * 0.05,
        "in_proj_bias": jax.random.normal(ks[1], (3 * embed_dim,),
                                          jnp.float32) * 0.01,
        "out_proj_weight": jax.random.normal(ks[2], (embed_dim, embed_dim),
                                             jnp.float32) * 0.05,
        "out_proj_bias": jax.random.normal(ks[3], (embed_dim,),
                                           jnp.float32) * 0.01,
    }

    query = jax.random.normal(ks[4], (L, N, embed_dim), jnp.float32)
    key_ = jax.random.normal(ks[5], (S, N, embed_dim), jnp.float32)
    value = jax.random.normal(ks[6], (S, N, embed_dim), jnp.float32)

    prepped = prepare_params(params, embed_dim, num_heads)

    out = cross_attention_forward(prepped, query, key_, value, num_heads)
    out = jax.block_until_ready(out)

    ref = reference_forward(params, query, key_, value, num_heads)
    assert out.shape == (L, N, embed_dim)
    # Tolerance accounts for bf16 matmul operands (f32 accumulation, f32 softmax).
    assert jnp.allclose(out, ref, atol=2e-2, rtol=2e-2), "mismatch vs reference"

    print("KERNEL_OK")
</pallas_src>

<mosaic_0001>
module attributes {stable_mosaic.version = 11 : i64} {
  func.func @_mha_fused_kernel(%arg0: memref<8x2x32xf32, #tpu.memory_space<vmem>>, %arg1: memref<8x2x32xf32, #tpu.memory_space<vmem>>, %arg2: memref<8x2x32xf32, #tpu.memory_space<vmem>>, %arg3: memref<96x32xf32, #tpu.memory_space<vmem>>, %arg4: memref<1x96xf32, #tpu.memory_space<vmem>>, %arg5: memref<32x32xf32, #tpu.memory_space<vmem>>, %arg6: memref<1x32xf32, #tpu.memory_space<vmem>>, %arg7: memref<8x2x32xf32, #tpu.memory_space<vmem>>) attributes {dimension_semantics = [], scalar_prefetch = 0 : i64, scratch_operands = 0 : i64, tpu.core_type = #tpu.core_type<tc>} {
    %c0 = arith.constant 0 : index
    %c0_0 = arith.constant 0 : index
    %0 = vector.load %arg3[%c0, %c0_0] : memref<96x32xf32, #tpu.memory_space<vmem>>, vector<96x32xf32>
    %1 = arith.truncf %0 : vector<96x32xf32> to vector<96x32xbf16>
    %2 = vector.extract_strided_slice %1 {offsets = [0, 0], sizes = [32, 32], strides = [1, 1]} : vector<96x32xbf16> to vector<32x32xbf16>
    %3 = vector.extract_strided_slice %1 {offsets = [32, 0], sizes = [32, 32], strides = [1, 1]} : vector<96x32xbf16> to vector<32x32xbf16>
    %4 = vector.extract_strided_slice %1 {offsets = [64, 0], sizes = [32, 32], strides = [1, 1]} : vector<96x32xbf16> to vector<32x32xbf16>
    %c0_1 = arith.constant 0 : index
    %c0_2 = arith.constant 0 : index
    %5 = vector.load %arg5[%c0_1, %c0_2] : memref<32x32xf32, #tpu.memory_space<vmem>>, vector<32x32xf32>
    %6 = arith.truncf %5 : vector<32x32xf32> to vector<32x32xbf16>
    %c0_3 = arith.constant 0 : index
    %c0_4 = arith.constant 0 : index
    %7 = vector.load %arg4[%c0_3, %c0_4] : memref<1x96xf32, #tpu.memory_space<vmem>>, vector<1x96xf32>
    %8 = vector.extract_strided_slice %7 {offsets = [0, 0], sizes = [1, 32], strides = [1, 1]} : vector<1x96xf32> to vector<1x32xf32>
    %9 = vector.extract_strided_slice %7 {offsets = [0, 32], sizes = [1, 32], strides = [1, 1]} : vector<1x96xf32> to vector<1x32xf32>
    %10 = vector.extract_strided_slice %7 {offsets = [0, 64], sizes = [1, 32], strides = [1, 1]} : vector<1x96xf32> to vector<1x32xf32>
    %c0_5 = arith.constant 0 : index
    %c0_6 = arith.constant 0 : index
    %11 = vector.load %arg6[%c0_5, %c0_6] : memref<1x32xf32, #tpu.memory_space<vmem>>, vector<1x32xf32>
    %c0_7 = arith.constant 0 : index
    %c0_8 = arith.constant 0 : index
    %c0_9 = arith.constant 0 : index
    %12 = vector.load %arg0[%c0_7, %c0_8, %c0_9] : memref<8x2x32xf32, #tpu.memory_space<vmem>>, vector<8x1x32xf32>
    %13 = vector.shape_cast %12 : vector<8x1x32xf32> to vector<8x32xf32>
    %14 = arith.truncf %13 : vector<8x32xf32> to vector<8x32xbf16>
    %c0_10 = arith.constant 0 : index
    %c0_11 = arith.constant 0 : index
    %c0_12 = arith.constant 0 : index
    %15 = vector.load %arg1[%c0_10, %c0_11, %c0_12] : memref<8x2x32xf32, #tpu.memory_space<vmem>>, vector<8x1x32xf32>
    %16 = vector.shape_cast %15 : vector<8x1x32xf32> to vector<8x32xf32>
    %17 = arith.truncf %16 : vector<8x32xf32> to vector<8x32xbf16>
    %c0_13 = arith.constant 0 : index
    %c0_14 = arith.constant 0 : index
    %c0_15 = arith.constant 0 : index
    %18 = vector.load %arg2[%c0_13, %c0_14, %c0_15] : memref<8x2x32xf32, #tpu.memory_space<vmem>>, vector<8x1x32xf32>
    %19 = vector.shape_cast %18 : vector<8x1x32xf32> to vector<8x32xf32>
    %20 = arith.truncf %19 : vector<8x32xf32> to vector<8x32xbf16>
    %cst = arith.constant dense<0.000000e+00> : vector<8x32xf32>
    %21 = tpu.matmul %14, %2, %cst {dimension_numbers = #tpu.dot_dimension_numbers<[1], [1], [0], [0], [0, 0, 1, 0], [], []>} : vector<8x32xbf16>, vector<32x32xbf16>, vector<8x32xf32> -> vector<8x32xf32>
    %22 = vector.broadcast %8 : vector<1x32xf32> to vector<8x32xf32>
    %23 = arith.addf %21, %22 : vector<8x32xf32>
    %cst_16 = arith.constant dense<0.000000e+00> : vector<8x32xf32>
    %24 = tpu.matmul %17, %3, %cst_16 {dimension_numbers = #tpu.dot_dimension_numbers<[1], [1], [0], [0], [0, 0, 1, 0], [], []>} : vector<8x32xbf16>, vector<32x32xbf16>, vector<8x32xf32> -> vector<8x32xf32>
    %25 = vector.broadcast %9 : vector<1x32xf32> to vector<8x32xf32>
    %26 = arith.addf %24, %25 : vector<8x32xf32>
    %cst_17 = arith.constant dense<0.000000e+00> : vector<8x32xf32>
    %27 = tpu.matmul %20, %4, %cst_17 {dimension_numbers = #tpu.dot_dimension_numbers<[1], [1], [0], [0], [0, 0, 1, 0], [], []>} : vector<8x32xbf16>, vector<32x32xbf16>, vector<8x32xf32> -> vector<8x32xf32>
    %28 = vector.broadcast %10 : vector<1x32xf32> to vector<8x32xf32>
    %29 = arith.addf %27, %28 : vector<8x32xf32>
    %30 = arith.truncf %23 : vector<8x32xf32> to vector<8x32xbf16>
    %31 = arith.truncf %26 : vector<8x32xf32> to vector<8x32xbf16>
    %32 = arith.truncf %29 : vector<8x32xf32> to vector<8x32xbf16>
    %cst_18 = arith.constant 0.000000e+00 : f32
    %33 = vector.broadcast %cst_18 : f32 to vector<8x32xf32>
    %34 = vector.extract_strided_slice %30 {offsets = [0, 0], sizes = [8, 8], strides = [1, 1]} : vector<8x32xbf16> to vector<8x8xbf16>
    %35 = vector.extract_strided_slice %31 {offsets = [0, 0], sizes = [8, 8], strides = [1, 1]} : vector<8x32xbf16> to vector<8x8xbf16>
    %cst_19 = arith.constant dense<0.000000e+00> : vector<8x8xf32>
    %36 = tpu.matmul %34, %35, %cst_19 {dimension_numbers = #tpu.dot_dimension_numbers<[1], [1], [0], [0], [0, 0, 1, 0], [], []>} : vector<8x8xbf16>, vector<8x8xbf16>, vector<8x8xf32> -> vector<8x8xf32>
    %cst_20 = arith.constant dense<0xFF800000> : vector<8xf32>
    %37 = vector.multi_reduction <maximumf>, %36, %cst_20 [1] : vector<8x8xf32> to vector<8xf32>
    %38 = vector.shape_cast %37 : vector<8xf32> to vector<8x1xf32>
    %39 = vector.broadcast %38 : vector<8x1xf32> to vector<8x8xf32>
    %40 = arith.subf %36, %39 : vector<8x8xf32>
    %41 = math.exp %40 : vector<8x8xf32>
    %cst_21 = arith.constant dense<0.000000e+00> : vector<8xf32>
    %42 = vector.multi_reduction <add>, %41, %cst_21 [1] : vector<8x8xf32> to vector<8xf32>
    %43 = vector.shape_cast %42 : vector<8xf32> to vector<8x1xf32>
    %44 = vector.broadcast %43 : vector<8x1xf32> to vector<8x8xf32>
    %45 = arith.divf %41, %44 : vector<8x8xf32>
    %46 = arith.truncf %45 : vector<8x8xf32> to vector<8x8xbf16>
    %47 = vector.extract_strided_slice %32 {offsets = [0, 0], sizes = [8, 8], strides = [1, 1]} : vector<8x32xbf16> to vector<8x8xbf16>
    %cst_22 = arith.constant dense<0.000000e+00> : vector<8x8xf32>
    %48 = tpu.matmul %46, %47, %cst_22 {dimension_numbers = #tpu.dot_dimension_numbers<[1], [0], [0], [1], [0, 0, 1, 1], [], []>} : vector<8x8xbf16>, vector<8x8xbf16>, vector<8x8xf32> -> vector<8x8xf32>
    %49 = arith.truncf %48 : vector<8x8xf32> to vector<8x8xbf16>
    %50 = vector.extract_strided_slice %6 {offsets = [0, 0], sizes = [32, 8], strides = [1, 1]} : vector<32x32xbf16> to vector<32x8xbf16>
    %cst_23 = arith.constant dense<0.000000e+00> : vector<8x32xf32>
    %51 = tpu.matmul %49, %50, %cst_23 {dimension_numbers = #tpu.dot_dimension_numbers<[1], [1], [0], [0], [0, 0, 1, 0], [], []>} : vector<8x8xbf16>, vector<32x8xbf16>, vector<8x32xf32> -> vector<8x32xf32>
    %52 = arith.addf %33, %51 : vector<8x32xf32>
    %53 = vector.extract_strided_slice %30 {offsets = [0, 8], sizes = [8, 8], strides = [1, 1]} : vector<8x32xbf16> to vector<8x8xbf16>
    %54 = vector.extract_strided_slice %31 {offsets = [0, 8], sizes = [8, 8], strides = [1, 1]} : vector<8x32xbf16> to vector<8x8xbf16>
    %cst_24 = arith.constant dense<0.000000e+00> : vector<8x8xf32>
    %55 = tpu.matmul %53, %54, %cst_24 {dimension_numbers = #tpu.dot_dimension_numbers<[1], [1], [0], [0], [0, 0, 1, 0], [], []>} : vector<8x8xbf16>, vector<8x8xbf16>, vector<8x8xf32> -> vector<8x8xf32>
    %cst_25 = arith.constant dense<0xFF800000> : vector<8xf32>
    %56 = vector.multi_reduction <maximumf>, %55, %cst_25 [1] : vector<8x8xf32> to vector<8xf32>
    %57 = vector.shape_cast %56 : vector<8xf32> to vector<8x1xf32>
    %58 = vector.broadcast %57 : vector<8x1xf32> to vector<8x8xf32>
    %59 = arith.subf %55, %58 : vector<8x8xf32>
    %60 = math.exp %59 : vector<8x8xf32>
    %cst_26 = arith.constant dense<0.000000e+00> : vector<8xf32>
    %61 = vector.multi_reduction <add>, %60, %cst_26 [1] : vector<8x8xf32> to vector<8xf32>
    %62 = vector.shape_cast %61 : vector<8xf32> to vector<8x1xf32>
    %63 = vector.broadcast %62 : vector<8x1xf32> to vector<8x8xf32>
    %64 = arith.divf %60, %63 : vector<8x8xf32>
    %65 = arith.truncf %64 : vector<8x8xf32> to vector<8x8xbf16>
    %66 = vector.extract_strided_slice %32 {offsets = [0, 8], sizes = [8, 8], strides = [1, 1]} : vector<8x32xbf16> to vector<8x8xbf16>
    %cst_27 = arith.constant dense<0.000000e+00> : vector<8x8xf32>
    %67 = tpu.matmul %65, %66, %cst_27 {dimension_numbers = #tpu.dot_dimension_numbers<[1], [0], [0], [1], [0, 0, 1, 1], [], []>} : vector<8x8xbf16>, vector<8x8xbf16>, vector<8x8xf32> -> vector<8x8xf32>
    %68 = arith.truncf %67 : vector<8x8xf32> to vector<8x8xbf16>
    %69 = vector.extract_strided_slice %6 {offsets = [0, 8], sizes = [32, 8], strides = [1, 1]} : vector<32x32xbf16> to vector<32x8xbf16>
    %cst_28 = arith.constant dense<0.000000e+00> : vector<8x32xf32>
    %70 = tpu.matmul %68, %69, %cst_28 {dimension_numbers = #tpu.dot_dimension_numbers<[1], [1], [0], [0], [0, 0, 1, 0], [], []>} : vector<8x8xbf16>, vector<32x8xbf16>, vector<8x32xf32> -> vector<8x32xf32>
    %71 = arith.addf %52, %70 : vector<8x32xf32>
    %72 = vector.extract_strided_slice %30 {offsets = [0, 16], sizes = [8, 8], strides = [1, 1]} : vector<8x32xbf16> to vector<8x8xbf16>
    %73 = vector.extract_strided_slice %31 {offsets = [0, 16], sizes = [8, 8], strides = [1, 1]} : vector<8x32xbf16> to vector<8x8xbf16>
    %cst_29 = arith.constant dense<0.000000e+00> : vector<8x8xf32>
    %74 = tpu.matmul %72, %73, %cst_29 {dimension_numbers = #tpu.dot_dimension_numbers<[1], [1], [0], [0], [0, 0, 1, 0], [], []>} : vector<8x8xbf16>, vector<8x8xbf16>, vector<8x8xf32> -> vector<8x8xf32>
    %cst_30 = arith.constant dense<0xFF800000> : vector<8xf32>
    %75 = vector.multi_reduction <maximumf>, %74, %cst_30 [1] : vector<8x8xf32> to vector<8xf32>
    %76 = vector.shape_cast %75 : vector<8xf32> to vector<8x1xf32>
    %77 = vector.broadcast %76 : vector<8x1xf32> to vector<8x8xf32>
    %78 = arith.subf %74, %77 : vector<8x8xf32>
    %79 = math.exp %78 : vector<8x8xf32>
    %cst_31 = arith.constant dense<0.000000e+00> : vector<8xf32>
    %80 = vector.multi_reduction <add>, %79, %cst_31 [1] : vector<8x8xf32> to vector<8xf32>
    %81 = vector.shape_cast %80 : vector<8xf32> to vector<8x1xf32>
    %82 = vector.broadcast %81 : vector<8x1xf32> to vector<8x8xf32>
    %83 = arith.divf %79, %82 : vector<8x8xf32>
    %84 = arith.truncf %83 : vector<8x8xf32> to vector<8x8xbf16>
    %85 = vector.extract_strided_slice %32 {offsets = [0, 16], sizes = [8, 8], strides = [1, 1]} : vector<8x32xbf16> to vector<8x8xbf16>
    %cst_32 = arith.constant dense<0.000000e+00> : vector<8x8xf32>
    %86 = tpu.matmul %84, %85, %cst_32 {dimension_numbers = #tpu.dot_dimension_numbers<[1], [0], [0], [1], [0, 0, 1, 1], [], []>} : vector<8x8xbf16>, vector<8x8xbf16>, vector<8x8xf32> -> vector<8x8xf32>
    %87 = arith.truncf %86 : vector<8x8xf32> to vector<8x8xbf16>
    %88 = vector.extract_strided_slice %6 {offsets = [0, 16], sizes = [32, 8], strides = [1, 1]} : vector<32x32xbf16> to vector<32x8xbf16>
    %cst_33 = arith.constant dense<0.000000e+00> : vector<8x32xf32>
    %89 = tpu.matmul %87, %88, %cst_33 {dimension_numbers = #tpu.dot_dimension_numbers<[1], [1], [0], [0], [0, 0, 1, 0], [], []>} : vector<8x8xbf16>, vector<32x8xbf16>, vector<8x32xf32> -> vector<8x32xf32>
    %90 = arith.addf %71, %89 : vector<8x32xf32>
    %91 = vector.extract_strided_slice %30 {offsets = [0, 24], sizes = [8, 8], strides = [1, 1]} : vector<8x32xbf16> to vector<8x8xbf16>
    %92 = vector.extract_strided_slice %31 {offsets = [0, 24], sizes = [8, 8], strides = [1, 1]} : vector<8x32xbf16> to vector<8x8xbf16>
    %cst_34 = arith.constant dense<0.000000e+00> : vector<8x8xf32>
    %93 = tpu.matmul %91, %92, %cst_34 {dimension_numbers = #tpu.dot_dimension_numbers<[1], [1], [0], [0], [0, 0, 1, 0], [], []>} : vector<8x8xbf16>, vector<8x8xbf16>, vector<8x8xf32> -> vector<8x8xf32>
    %cst_35 = arith.constant dense<0xFF800000> : vector<8xf32>
    %94 = vector.multi_reduction <maximumf>, %93, %cst_35 [1] : vector<8x8xf32> to vector<8xf32>
    %95 = vector.shape_cast %94 : vector<8xf32> to vector<8x1xf32>
    %96 = vector.broadcast %95 : vector<8x1xf32> to vector<8x8xf32>
    %97 = arith.subf %93, %96 : vector<8x8xf32>
    %98 = math.exp %97 : vector<8x8xf32>
    %cst_36 = arith.constant dense<0.000000e+00> : vector<8xf32>
    %99 = vector.multi_reduction <add>, %98, %cst_36 [1] : vector<8x8xf32> to vector<8xf32>
    %100 = vector.shape_cast %99 : vector<8xf32> to vector<8x1xf32>
    %101 = vector.broadcast %100 : vector<8x1xf32> to vector<8x8xf32>
    %102 = arith.divf %98, %101 : vector<8x8xf32>
    %103 = arith.truncf %102 : vector<8x8xf32> to vector<8x8xbf16>
    %104 = vector.extract_strided_slice %32 {offsets = [0, 24], sizes = [8, 8], strides = [1, 1]} : vector<8x32xbf16> to vector<8x8xbf16>
    %cst_37 = arith.constant dense<0.000000e+00> : vector<8x8xf32>
    %105 = tpu.matmul %103, %104, %cst_37 {dimension_numbers = #tpu.dot_dimension_numbers<[1], [0], [0], [1], [0, 0, 1, 1], [], []>} : vector<8x8xbf16>, vector<8x8xbf16>, vector<8x8xf32> -> vector<8x8xf32>
    %106 = arith.truncf %105 : vector<8x8xf32> to vector<8x8xbf16>
    %107 = vector.extract_strided_slice %6 {offsets = [0, 24], sizes = [32, 8], strides = [1, 1]} : vector<32x32xbf16> to vector<32x8xbf16>
    %cst_38 = arith.constant dense<0.000000e+00> : vector<8x32xf32>
    %108 = tpu.matmul %106, %107, %cst_38 {dimension_numbers = #tpu.dot_dimension_numbers<[1], [1], [0], [0], [0, 0, 1, 0], [], []>} : vector<8x8xbf16>, vector<32x8xbf16>, vector<8x32xf32> -> vector<8x32xf32>
    %109 = arith.addf %90, %108 : vector<8x32xf32>
    %110 = vector.broadcast %11 : vector<1x32xf32> to vector<8x32xf32>
    %111 = arith.addf %109, %110 : vector<8x32xf32>
    %c0_39 = arith.constant 0 : index
    %c0_40 = arith.constant 0 : index
    %c0_41 = arith.constant 0 : index
    %112 = vector.load %arg7[%c0_39, %c0_40, %c0_41] : memref<8x2x32xf32, #tpu.memory_space<vmem>>, vector<8x1x32xf32>
    %113 = vector.shape_cast %112 : vector<8x1x32xf32> to vector<8x32xf32>
    %114 = vector.shape_cast %111 : vector<8x32xf32> to vector<8x1x32xf32>
    tpu.vector_store %arg7[%c0_39, %c0_40, %c0_41], %114 {strides = array<i32>} : memref<8x2x32xf32, #tpu.memory_space<vmem>>, vector<8x1x32xf32>,
    %c0_42 = arith.constant 0 : index
    %c1 = arith.constant 1 : index
    %c0_43 = arith.constant 0 : index
    %115 = vector.load %arg0[%c0_42, %c1, %c0_43] : memref<8x2x32xf32, #tpu.memory_space<vmem>>, vector<8x1x32xf32>
    %116 = vector.shape_cast %115 : vector<8x1x32xf32> to vector<8x32xf32>
    %117 = arith.truncf %116 : vector<8x32xf32> to vector<8x32xbf16>
    %c0_44 = arith.constant 0 : index
    %c1_45 = arith.constant 1 : index
    %c0_46 = arith.constant 0 : index
    %118 = vector.load %arg1[%c0_44, %c1_45, %c0_46] : memref<8x2x32xf32, #tpu.memory_space<vmem>>, vector<8x1x32xf32>
    %119 = vector.shape_cast %118 : vector<8x1x32xf32> to vector<8x32xf32>
    %120 = arith.truncf %119 : vector<8x32xf32> to vector<8x32xbf16>
    %c0_47 = arith.constant 0 : index
    %c1_48 = arith.constant 1 : index
    %c0_49 = arith.constant 0 : index
    %121 = vector.load %arg2[%c0_47, %c1_48, %c0_49] : memref<8x2x32xf32, #tpu.memory_space<vmem>>, vector<8x1x32xf32>
    %122 = vector.shape_cast %121 : vector<8x1x32xf32> to vector<8x32xf32>
    %123 = arith.truncf %122 : vector<8x32xf32> to vector<8x32xbf16>
    %cst_50 = arith.constant dense<0.000000e+00> : vector<8x32xf32>
    %124 = tpu.matmul %117, %2, %cst_50 {dimension_numbers = #tpu.dot_dimension_numbers<[1], [1], [0], [0], [0, 0, 1, 0], [], []>} : vector<8x32xbf16>, vector<32x32xbf16>, vector<8x32xf32> -> vector<8x32xf32>
    %125 = vector.broadcast %8 : vector<1x32xf32> to vector<8x32xf32>
    %126 = arith.addf %124, %125 : vector<8x32xf32>
    %cst_51 = arith.constant dense<0.000000e+00> : vector<8x32xf32>
    %127 = tpu.matmul %120, %3, %cst_51 {dimension_numbers = #tpu.dot_dimension_numbers<[1], [1], [0], [0], [0, 0, 1, 0], [], []>} : vector<8x32xbf16>, vector<32x32xbf16>, vector<8x32xf32> -> vector<8x32xf32>
    %128 = vector.broadcast %9 : vector<1x32xf32> to vector<8x32xf32>
    %129 = arith.addf %127, %128 : vector<8x32xf32>
    %cst_52 = arith.constant dense<0.000000e+00> : vector<8x32xf32>
    %130 = tpu.matmul %123, %4, %cst_52 {dimension_numbers = #tpu.dot_dimension_numbers<[1], [1], [0], [0], [0, 0, 1, 0], [], []>} : vector<8x32xbf16>, vector<32x32xbf16>, vector<8x32xf32> -> vector<8x32xf32>
    %131 = vector.broadcast %10 : vector<1x32xf32> to vector<8x32xf32>
    %132 = arith.addf %130, %131 : vector<8x32xf32>
    %133 = arith.truncf %126 : vector<8x32xf32> to vector<8x32xbf16>
    %134 = arith.truncf %129 : vector<8x32xf32> to vector<8x32xbf16>
    %135 = arith.truncf %132 : vector<8x32xf32> to vector<8x32xbf16>
    %cst_53 = arith.constant 0.000000e+00 : f32
    %136 = vector.broadcast %cst_53 : f32 to vector<8x32xf32>
    %137 = vector.extract_strided_slice %133 {offsets = [0, 0], sizes = [8, 8], strides = [1, 1]} : vector<8x32xbf16> to vector<8x8xbf16>
    %138 = vector.extract_strided_slice %134 {offsets = [0, 0], sizes = [8, 8], strides = [1, 1]} : vector<8x32xbf16> to vector<8x8xbf16>
    %cst_54 = arith.constant dense<0.000000e+00> : vector<8x8xf32>
    %139 = tpu.matmul %137, %138, %cst_54 {dimension_numbers = #tpu.dot_dimension_numbers<[1], [1], [0], [0], [0, 0, 1, 0], [], []>} : vector<8x8xbf16>, vector<8x8xbf16>, vector<8x8xf32> -> vector<8x8xf32>
    %cst_55 = arith.constant dense<0xFF800000> : vector<8xf32>
    %140 = vector.multi_reduction <maximumf>, %139, %cst_55 [1] : vector<8x8xf32> to vector<8xf32>
    %141 = vector.shape_cast %140 : vector<8xf32> to vector<8x1xf32>
    %142 = vector.broadcast %141 : vector<8x1xf32> to vector<8x8xf32>
    %143 = arith.subf %139, %142 : vector<8x8xf32>
    %144 = math.exp %143 : vector<8x8xf32>
    %cst_56 = arith.constant dense<0.000000e+00> : vector<8xf32>
    %145 = vector.multi_reduction <add>, %144, %cst_56 [1] : vector<8x8xf32> to vector<8xf32>
    %146 = vector.shape_cast %145 : vector<8xf32> to vector<8x1xf32>
    %147 = vector.broadcast %146 : vector<8x1xf32> to vector<8x8xf32>
    %148 = arith.divf %144, %147 : vector<8x8xf32>
    %149 = arith.truncf %148 : vector<8x8xf32> to vector<8x8xbf16>
    %150 = vector.extract_strided_slice %135 {offsets = [0, 0], sizes = [8, 8], strides = [1, 1]} : vector<8x32xbf16> to vector<8x8xbf16>
    %cst_57 = arith.constant dense<0.000000e+00> : vector<8x8xf32>
    %151 = tpu.matmul %149, %150, %cst_57 {dimension_numbers = #tpu.dot_dimension_numbers<[1], [0], [0], [1], [0, 0, 1, 1], [], []>} : vector<8x8xbf16>, vector<8x8xbf16>, vector<8x8xf32> -> vector<8x8xf32>
    %152 = arith.truncf %151 : vector<8x8xf32> to vector<8x8xbf16>
    %153 = vector.extract_strided_slice %6 {offsets = [0, 0], sizes = [32, 8], strides = [1, 1]} : vector<32x32xbf16> to vector<32x8xbf16>
    %cst_58 = arith.constant dense<0.000000e+00> : vector<8x32xf32>
    %154 = tpu.matmul %152, %153, %cst_58 {dimension_numbers = #tpu.dot_dimension_numbers<[1], [1], [0], [0], [0, 0, 1, 0], [], []>} : vector<8x8xbf16>, vector<32x8xbf16>, vector<8x32xf32> -> vector<8x32xf32>
    %155 = arith.addf %136, %154 : vector<8x32xf32>
    %156 = vector.extract_strided_slice %133 {offsets = [0, 8], sizes = [8, 8], strides = [1, 1]} : vector<8x32xbf16> to vector<8x8xbf16>
    %157 = vector.extract_strided_slice %134 {offsets = [0, 8], sizes = [8, 8], strides = [1, 1]} : vector<8x32xbf16> to vector<8x8xbf16>
    %cst_59 = arith.constant dense<0.000000e+00> : vector<8x8xf32>
    %158 = tpu.matmul %156, %157, %cst_59 {dimension_numbers = #tpu.dot_dimension_numbers<[1], [1], [0], [0], [0, 0, 1, 0], [], []>} : vector<8x8xbf16>, vector<8x8xbf16>, vector<8x8xf32> -> vector<8x8xf32>
    %cst_60 = arith.constant dense<0xFF800000> : vector<8xf32>
    %159 = vector.multi_reduction <maximumf>, %158, %cst_60 [1] : vector<8x8xf32> to vector<8xf32>
    %160 = vector.shape_cast %159 : vector<8xf32> to vector<8x1xf32>
    %161 = vector.broadcast %160 : vector<8x1xf32> to vector<8x8xf32>
    %162 = arith.subf %158, %161 : vector<8x8xf32>
    %163 = math.exp %162 : vector<8x8xf32>
    %cst_61 = arith.constant dense<0.000000e+00> : vector<8xf32>
    %164 = vector.multi_reduction <add>, %163, %cst_61 [1] : vector<8x8xf32> to vector<8xf32>
    %165 = vector.shape_cast %164 : vector<8xf32> to vector<8x1xf32>
    %166 = vector.broadcast %165 : vector<8x1xf32> to vector<8x8xf32>
    %167 = arith.divf %163, %166 : vector<8x8xf32>
    %168 = arith.truncf %167 : vector<8x8xf32> to vector<8x8xbf16>
    %169 = vector.extract_strided_slice %135 {offsets = [0, 8], sizes = [8, 8], strides = [1, 1]} : vector<8x32xbf16> to vector<8x8xbf16>
    %cst_62 = arith.constant dense<0.000000e+00> : vector<8x8xf32>
    %170 = tpu.matmul %168, %169, %cst_62 {dimension_numbers = #tpu.dot_dimension_numbers<[1], [0], [0], [1], [0, 0, 1, 1], [], []>} : vector<8x8xbf16>, vector<8x8xbf16>, vector<8x8xf32> -> vector<8x8xf32>
    %171 = arith.truncf %170 : vector<8x8xf32> to vector<8x8xbf16>
    %172 = vector.extract_strided_slice %6 {offsets = [0, 8], sizes = [32, 8], strides = [1, 1]} : vector<32x32xbf16> to vector<32x8xbf16>
    %cst_63 = arith.constant dense<0.000000e+00> : vector<8x32xf32>
    %173 = tpu.matmul %171, %172, %cst_63 {dimension_numbers = #tpu.dot_dimension_numbers<[1], [1], [0], [0], [0, 0, 1, 0], [], []>} : vector<8x8xbf16>, vector<32x8xbf16>, vector<8x32xf32> -> vector<8x32xf32>
    %174 = arith.addf %155, %173 : vector<8x32xf32>
    %175 = vector.extract_strided_slice %133 {offsets = [0, 16], sizes = [8, 8], strides = [1, 1]} : vector<8x32xbf16> to vector<8x8xbf16>
    %176 = vector.extract_strided_slice %134 {offsets = [0, 16], sizes = [8, 8], strides = [1, 1]} : vector<8x32xbf16> to vector<8x8xbf16>
    %cst_64 = arith.constant dense<0.000000e+00> : vector<8x8xf32>
    %177 = tpu.matmul %175, %176, %cst_64 {dimension_numbers = #tpu.dot_dimension_numbers<[1], [1], [0], [0], [0, 0, 1, 0], [], []>} : vector<8x8xbf16>, vector<8x8xbf16>, vector<8x8xf32> -> vector<8x8xf32>
    %cst_65 = arith.constant dense<0xFF800000> : vector<8xf32>
    %178 = vector.multi_reduction <maximumf>, %177, %cst_65 [1] : vector<8x8xf32> to vector<8xf32>
    %179 = vector.shape_cast %178 : vector<8xf32> to vector<8x1xf32>
    %180 = vector.broadcast %179 : vector<8x1xf32> to vector<8x8xf32>
    %181 = arith.subf %177, %180 : vector<8x8xf32>
    %182 = math.exp %181 : vector<8x8xf32>
    %cst_66 = arith.constant dense<0.000000e+00> : vector<8xf32>
    %183 = vector.multi_reduction <add>, %182, %cst_66 [1] : vector<8x8xf32> to vector<8xf32>
    %184 = vector.shape_cast %183 : vector<8xf32> to vector<8x1xf32>
    %185 = vector.broadcast %184 : vector<8x1xf32> to vector<8x8xf32>
    %186 = arith.divf %182, %185 : vector<8x8xf32>
    %187 = arith.truncf %186 : vector<8x8xf32> to vector<8x8xbf16>
    %188 = vector.extract_strided_slice %135 {offsets = [0, 16], sizes = [8, 8], strides = [1, 1]} : vector<8x32xbf16> to vector<8x8xbf16>
    %cst_67 = arith.constant dense<0.000000e+00> : vector<8x8xf32>
    %189 = tpu.matmul %187, %188, %cst_67 {dimension_numbers = #tpu.dot_dimension_numbers<[1], [0], [0], [1], [0, 0, 1, 1], [], []>} : vector<8x8xbf16>, vector<8x8xbf16>, vector<8x8xf32> -> vector<8x8xf32>
    %190 = arith.truncf %189 : vector<8x8xf32> to vector<8x8xbf16>
    %191 = vector.extract_strided_slice %6 {offsets = [0, 16], sizes = [32, 8], strides = [1, 1]} : vector<32x32xbf16> to vector<32x8xbf16>
    %cst_68 = arith.constant dense<0.000000e+00> : vector<8x32xf32>
    %192 = tpu.matmul %190, %191, %cst_68 {dimension_numbers = #tpu.dot_dimension_numbers<[1], [1], [0], [0], [0, 0, 1, 0], [], []>} : vector<8x8xbf16>, vector<32x8xbf16>, vector<8x32xf32> -> vector<8x32xf32>
    %193 = arith.addf %174, %192 : vector<8x32xf32>
    %194 = vector.extract_strided_slice %133 {offsets = [0, 24], sizes = [8, 8], strides = [1, 1]} : vector<8x32xbf16> to vector<8x8xbf16>
    %195 = vector.extract_strided_slice %134 {offsets = [0, 24], sizes = [8, 8], strides = [1, 1]} : vector<8x32xbf16> to vector<8x8xbf16>
    %cst_69 = arith.constant dense<0.000000e+00> : vector<8x8xf32>
    %196 = tpu.matmul %194, %195, %cst_69 {dimension_numbers = #tpu.dot_dimension_numbers<[1], [1], [0], [0], [0, 0, 1, 0], [], []>} : vector<8x8xbf16>, vector<8x8xbf16>, vector<8x8xf32> -> vector<8x8xf32>
    %cst_70 = arith.constant dense<0xFF800000> : vector<8xf32>
    %197 = vector.multi_reduction <maximumf>, %196, %cst_70 [1] : vector<8x8xf32> to vector<8xf32>
    %198 = vector.shape_cast %197 : vector<8xf32> to vector<8x1xf32>
    %199 = vector.broadcast %198 : vector<8x1xf32> to vector<8x8xf32>
    %200 = arith.subf %196, %199 : vector<8x8xf32>
    %201 = math.exp %200 : vector<8x8xf32>
    %cst_71 = arith.constant dense<0.000000e+00> : vector<8xf32>
    %202 = vector.multi_reduction <add>, %201, %cst_71 [1] : vector<8x8xf32> to vector<8xf32>
    %203 = vector.shape_cast %202 : vector<8xf32> to vector<8x1xf32>
    %204 = vector.broadcast %203 : vector<8x1xf32> to vector<8x8xf32>
    %205 = arith.divf %201, %204 : vector<8x8xf32>
    %206 = arith.truncf %205 : vector<8x8xf32> to vector<8x8xbf16>
    %207 = vector.extract_strided_slice %135 {offsets = [0, 24], sizes = [8, 8], strides = [1, 1]} : vector<8x32xbf16> to vector<8x8xbf16>
    %cst_72 = arith.constant dense<0.000000e+00> : vector<8x8xf32>
    %208 = tpu.matmul %206, %207, %cst_72 {dimension_numbers = #tpu.dot_dimension_numbers<[1], [0], [0], [1], [0, 0, 1, 1], [], []>} : vector<8x8xbf16>, vector<8x8xbf16>, vector<8x8xf32> -> vector<8x8xf32>
    %209 = arith.truncf %208 : vector<8x8xf32> to vector<8x8xbf16>
    %210 = vector.extract_strided_slice %6 {offsets = [0, 24], sizes = [32, 8], strides = [1, 1]} : vector<32x32xbf16> to vector<32x8xbf16>
    %cst_73 = arith.constant dense<0.000000e+00> : vector<8x32xf32>
    %211 = tpu.matmul %209, %210, %cst_73 {dimension_numbers = #tpu.dot_dimension_numbers<[1], [1], [0], [0], [0, 0, 1, 0], [], []>} : vector<8x8xbf16>, vector<32x8xbf16>, vector<8x32xf32> -> vector<8x32xf32>
    %212 = arith.addf %193, %211 : vector<8x32xf32>
    %213 = vector.broadcast %11 : vector<1x32xf32> to vector<8x32xf32>
    %214 = arith.addf %212, %213 : vector<8x32xf32>
    %c0_74 = arith.constant 0 : index
    %c1_75 = arith.constant 1 : index
    %c0_76 = arith.constant 0 : index
    %215 = vector.load %arg7[%c0_74, %c1_75, %c0_76] : memref<8x2x32xf32, #tpu.memory_space<vmem>>, vector<8x1x32xf32>
    %216 = vector.shape_cast %215 : vector<8x1x32xf32> to vector<8x32xf32>
    %217 = vector.shape_cast %214 : vector<8x32xf32> to vector<8x1x32xf32>
    tpu.vector_store %arg7[%c0_74, %c1_75, %c0_76], %217 {strides = array<i32>} : memref<8x2x32xf32, #tpu.memory_space<vmem>>, vector<8x1x32xf32>,
    return
  }
}

</mosaic_0001>

<llo_original>
// kernel: tpu_custom_call.1
$region0: #{tpu_custom_call.1}
  #allocation0 [shape = 'u32[]', space=smem, size = 0x4, offset = 0x4, fixed_abs, tag = 'smem constant byte address 0x4 - core index']
  #allocation1 [shape = 'u32[72,128]{1,0:T(1,128)}', space=vmem, size = 0x9000, scoped, tag = 'internal scratch']
  %s0 = inlined_call_operand.vmem [shape: f32[8,2,32], index: 0, kind: input, shape index: {}]
  %s1 = inlined_call_operand.vmem [shape: f32[8,2,32], index: 1, kind: input, shape index: {}]
  %s2 = inlined_call_operand.vmem [shape: f32[8,2,32], index: 2, kind: input, shape index: {}]
  %s3 = inlined_call_operand.vmem [shape: f32[96,32], index: 3, kind: input, shape index: {}]
  %s4 = inlined_call_operand.vmem [shape: f32[1,96], index: 4, kind: input, shape index: {}]
  %s5 = inlined_call_operand.vmem [shape: f32[32,32], index: 5, kind: input, shape index: {}]
  %s6 = inlined_call_operand.vmem [shape: f32[1,32], index: 6, kind: input, shape index: {}]
  %s7 = inlined_call_operand.hbm [shape: f32[8,2,32], index: 7, kind: output, shape index: {}]
  %s8 = sld [smem:[#allocation0]]
  $region38: #{tpu_custom_call.1} parent=0
    _
  %s10 = ssub.s32 1, %s8
  %s11 = scalar_select 0, %s10, %s8
  $region1: #{tpu_custom_call.1} parent=0
    #allocation2 [shape = 'u8[8192]{0}', space=vmem, size = 0x2000, scoped, tag = 'output window, operand 0, single buffered']
    #allocation3 [shape = 's32[1]{0}', space=sflag, size = 0x4, scoped, tag = 'scoped memory for tpu_custom_call.1']
    %12 = vsyncpa [#allocation3], 0
    // Predicated region
    $region2: #{tpu_custom_call.1} parent=1 // pred_check
      _
    $region3: #{tpu_custom_call.1} parent=1 // pred_check_branch
      %14 = sbr.rel (0) target = $region5
    $region4: #{tpu_custom_call.1} parent=1 // pred_region
      _
    $region5: #{tpu_custom_call.1} parent=1 // pred_fallthru
      _
    // Predicated region
    $region6: #{tpu_custom_call.1} parent=1 // pred_check
      _
    $region7: #{tpu_custom_call.1} parent=1 // pred_check_branch
      %16 = sbr.rel (0) target = $region9
    $region8: #{tpu_custom_call.1} parent=1 // pred_region
      _
    $region9: #{tpu_custom_call.1} parent=1 // pred_fallthru
      _
    // Predicated region
    $region10: #{tpu_custom_call.1} parent=1 // pred_check
      _
    $region11: #{tpu_custom_call.1} parent=1 // pred_check_branch
      %18 = sbr.rel (0) target = $region13
    $region12: #{tpu_custom_call.1} parent=1 // pred_region
      _
    $region13: #{tpu_custom_call.1} parent=1 // pred_fallthru
      _
    // Predicated region
    $region14: #{tpu_custom_call.1} parent=1 // pred_check
      _
    $region15: #{tpu_custom_call.1} parent=1 // pred_check_branch
      %20 = sbr.rel (0) target = $region17
    $region16: #{tpu_custom_call.1} parent=1 // pred_region
      _
    $region17: #{tpu_custom_call.1} parent=1 // pred_fallthru
      _
    // Predicated region
    $region18: #{tpu_custom_call.1} parent=1 // pred_check
      _
    $region19: #{tpu_custom_call.1} parent=1 // pred_check_branch
      %22 = sbr.rel (0) target = $region21
    $region20: #{tpu_custom_call.1} parent=1 // pred_region
      _
    $region21: #{tpu_custom_call.1} parent=1 // pred_fallthru
      _
    // Predicated region
    $region22: #{tpu_custom_call.1} parent=1 // pred_check
      _
    $region23: #{tpu_custom_call.1} parent=1 // pred_check_branch
      %24 = sbr.rel (0) target = $region25
    $region24: #{tpu_custom_call.1} parent=1 // pred_region
      _
    $region25: #{tpu_custom_call.1} parent=1 // pred_fallthru
      _
    // Predicated region
    $region26: #{tpu_custom_call.1} parent=1 // pred_check
      _
    $region27: #{tpu_custom_call.1} parent=1 // pred_check_branch
      %26 = sbr.rel (0) target = $region29
    $region28: #{tpu_custom_call.1} parent=1 // pred_region
      _
    $region29: #{tpu_custom_call.1} parent=1 // pred_fallthru
      _
    %v28 = vld [vmem:[%s3] sm:$0xff]
    %v29 = vld [vmem:[%s3 + $0x8] sm:$0xff]
    %v30 = vld [vmem:[%s3 + $0x10] sm:$0xff]
    %v31 = vld [vmem:[%s3 + $0x18] sm:$0xff]
    %v32 = vld [vmem:[%s3 + $0x20] sm:$0xff]
    %v33 = vld [vmem:[%s3 + $0x28] sm:$0xff]
    %v34 = vld [vmem:[%s3 + $0x30] sm:$0xff]
    %v35 = vld [vmem:[%s3 + $0x38] sm:$0xff]
    %v36 = vld [vmem:[%s3 + $0x40] sm:$0xff]
    %v37 = vld [vmem:[%s3 + $0x48] sm:$0xff]
    %v38 = vld [vmem:[%s3 + $0x50] sm:$0xff]
    %v39 = vld [vmem:[%s3 + $0x58] sm:$0xff]
    %v40 = vpack.c.bf16 %v28, %v28
    %v41 = vpack.c.bf16 %v29, %v29
    %v42 = vpack.c.bf16 %v30, %v30
    %v43 = vpack.c.bf16 %v31, %v31
    %v44 = vpack.c.bf16 %v32, %v32
    %v45 = vpack.c.bf16 %v33, %v33
    %v46 = vpack.c.bf16 %v34, %v34
    %v47 = vpack.c.bf16 %v35, %v35
    %v48 = vpack.c.bf16 %v36, %v36
    %v49 = vpack.c.bf16 %v37, %v37
    %v50 = vpack.c.bf16 %v38, %v38
    %v51 = vpack.c.bf16 %v39, %v39
    %v52 = vld [vmem:[%s5] sm:$0xff]
    %v53 = vld [vmem:[%s5 + $0x8] sm:$0xff]
    %v54 = vld [vmem:[%s5 + $0x10] sm:$0xff]
    %v55 = vld [vmem:[%s5 + $0x18] sm:$0xff]
    %v56 = vpack.c.bf16 %v52, %v52
    %v57 = vpack.c.bf16 %v53, %v53
    %v58 = vpack.c.bf16 %v54, %v54
    %v59 = vpack.c.bf16 %v55, %v55
    %v60 = vld [vmem:[%s4] sm:$0x1]
    %v61 = vld [vmem:[%s6] sm:$0x1]
    %v62 = vld [vmem:[%s0] sm:$0x1]
    %v63 = vld [vmem:[%s0 + $0x2] sm:$0x1]
    %v64 = vld [vmem:[%s0 + $0x4] sm:$0x1]
    %v65 = vld [vmem:[%s0 + $0x6] sm:$0x1]
    %v66 = vld [vmem:[%s0 + $0x8] sm:$0x1]
    %v67 = vld [vmem:[%s0 + $0xa] sm:$0x1]
    %v68 = vld [vmem:[%s0 + $0xc] sm:$0x1]
    %v69 = vld [vmem:[%s0 + $0xe] sm:$0x1]
    %v70 = vpack.c.bf16 %v62, %v62
    %v71 = vpack.c.bf16 %v63, %v63
    %v72 = vpack.c.bf16 %v64, %v64
    %v73 = vpack.c.bf16 %v65, %v65
    %v74 = vpack.c.bf16 %v66, %v66
    %v75 = vpack.c.bf16 %v67, %v67
    %v76 = vpack.c.bf16 %v68, %v68
    %v77 = vpack.c.bf16 %v69, %v69
    %v78 = vld [vmem:[%s1] sm:$0x1]
    %v79 = vld [vmem:[%s1 + $0x2] sm:$0x1]
    %v80 = vld [vmem:[%s1 + $0x4] sm:$0x1]
    %v81 = vld [vmem:[%s1 + $0x6] sm:$0x1]
    %v82 = vld [vmem:[%s1 + $0x8] sm:$0x1]
    %v83 = vld [vmem:[%s1 + $0xa] sm:$0x1]
    %v84 = vld [vmem:[%s1 + $0xc] sm:$0x1]
    %v85 = vld [vmem:[%s1 + $0xe] sm:$0x1]
    %v86 = vpack.c.bf16 %v78, %v78
    %v87 = vpack.c.bf16 %v79, %v79
    %v88 = vpack.c.bf16 %v80, %v80
    %v89 = vpack.c.bf16 %v81, %v81
    %v90 = vpack.c.bf16 %v82, %v82
    %v91 = vpack.c.bf16 %v83, %v83
    %v92 = vpack.c.bf16 %v84, %v84
    %v93 = vpack.c.bf16 %v85, %v85
    %v94 = vld [vmem:[%s2] sm:$0x1]
    %v95 = vld [vmem:[%s2 + $0x2] sm:$0x1]
    %v96 = vld [vmem:[%s2 + $0x4] sm:$0x1]
    %v97 = vld [vmem:[%s2 + $0x6] sm:$0x1]
    %v98 = vld [vmem:[%s2 + $0x8] sm:$0x1]
    %v99 = vld [vmem:[%s2 + $0xa] sm:$0x1]
    %v100 = vld [vmem:[%s2 + $0xc] sm:$0x1]
    %v101 = vld [vmem:[%s2 + $0xe] sm:$0x1]
    %v102 = vpack.c.bf16 %v94, %v94
    %v103 = vpack.c.bf16 %v95, %v95
    %v104 = vpack.c.bf16 %v96, %v96
    %v105 = vpack.c.bf16 %v97, %v97
    %v106 = vpack.c.bf16 %v98, %v98
    %v107 = vpack.c.bf16 %v99, %v99
    %v108 = vpack.c.bf16 %v100, %v100
    %v109 = vpack.c.bf16 %v101, %v101
    %v111 = vperm.slane %v60, 0
    %v121 = vunpack.c.l.b16 %v70
    %v122 = vunpack.c.l.b16 %v71
    %v123 = vunpack.c.l.b16 %v72
    %v124 = vunpack.c.l.b16 %v73
    %v125 = vunpack.c.l.b16 %v74
    %v126 = vunpack.c.l.b16 %v75
    %v127 = vunpack.c.l.b16 %v76
    %v128 = vunpack.c.l.b16 %v77
    %v129 = vrot.slane %v122, 7
    %vm130 = vcmask 1041409
    %v131 = vsel %vm130, %v129, %v121
    %v132 = vrot.slane %v123, 6
    %vm133 = vcmask 1042434
    %v134 = vsel %vm133, %v132, %v131
    %v135 = vrot.slane %v124, 5
    %vm136 = vcmask 1043459
    %v137 = vsel %vm136, %v135, %v134
    %v138 = vrot.slane %v125, 4
    %vm139 = vcmask 1044484
    %v140 = vsel %vm139, %v138, %v137
    %v141 = vrot.slane %v126, 3
    %vm142 = vcmask 1045509
    %v143 = vsel %vm142, %v141, %v140
    %v144 = vrot.slane %v127, 2
    %vm145 = vcmask 1046534
    %v146 = vsel %vm145, %v144, %v143
    %v147 = vrot.slane %v128, 1
    %vm148 = vcmask 1047559
    %v149 = vsel %vm148, %v147, %v146
    %v150 = vpack.c.b16 %v149, %v149
    %v155 = vunpack.c.l.b16 %v40
    %v156 = vunpack.c.l.b16 %v41
    %v157 = vunpack.c.l.b16 %v42
    %v158 = vunpack.c.l.b16 %v43
    %v159 = vpack.c.b16 %v156, %v155
    %v160 = vpack.c.b16 %v158, %v157
    %vm161 = vcmask 261120
    %v163 = vsel %vm161, %v150, 0
    %v166 = vsel %vm161, %v159, 0
    %v169 = vsel %vm161, %v160, 0
    %171 = vmatpush.bf16.xpose.msra.mxu0 0
    %172 = vmatpush.bf16.xpose.msra.mxu0 0
    %173 = vmatpush.bf16.xpose.msra.mxu0 0
    %174 = vmatpush.bf16.xpose.msra.mxu0 0
    %175 = vmatpush.bf16.xpose.msra.mxu0 0
    %176 = vmatpush.bf16.xpose.msra.mxu0 0
    %177 = vmatpush.bf16.xpose.msra.mxu0 %v169
    %178 = vmatpush.bf16.xpose.msra.mxu0 %v166
    %179 = vmatmul.bf16.gmra.mxu0 %v163
    %v180 = vpop.f32.mrf.mxu0
    %v181 = vadd.f32 %v111, %v180
    %v182 = vpop.f32.mrf.mxu0
    %183 = vdwg.mxu0
    %v192 = vunpack.c.l.b16 %v86
    %v193 = vunpack.c.l.b16 %v87
    %v194 = vunpack.c.l.b16 %v88
    %v195 = vunpack.c.l.b16 %v89
    %v196 = vunpack.c.l.b16 %v90
    %v197 = vunpack.c.l.b16 %v91
    %v198 = vunpack.c.l.b16 %v92
    %v199 = vunpack.c.l.b16 %v93
    %v200 = vrot.slane %v193, 7
    %v201 = vsel %vm130, %v200, %v192
    %v202 = vrot.slane %v194, 6
    %v203 = vsel %vm133, %v202, %v201
    %v204 = vrot.slane %v195, 5
    %v205 = vsel %vm136, %v204, %v203
    %v206 = vrot.slane %v196, 4
    %v207 = vsel %vm139, %v206, %v205
    %v208 = vrot.slane %v197, 3
    %v209 = vsel %vm142, %v208, %v207
    %v210 = vrot.slane %v198, 2
    %v211 = vsel %vm145, %v210, %v209
    %v212 = vrot.slane %v199, 1
    %v213 = vsel %vm148, %v212, %v211
    %v214 = vpack.c.b16 %v213, %v213
    %v219 = vunpack.c.l.b16 %v44
    %v220 = vunpack.c.l.b16 %v45
    %v221 = vunpack.c.l.b16 %v46
    %v222 = vunpack.c.l.b16 %v47
    %v223 = vpack.c.b16 %v220, %v219
    %v224 = vpack.c.b16 %v222, %v221
    %225 = vrot.lane.b32.xlu0 %v111, 96
    %v226 = vpop.permute.xlu0 %225
    %v229 = vsel %vm161, %v214, 0
    %v232 = vsel %vm161, %v223, 0
    %v235 = vsel %vm161, %v224, 0
    %237 = vmatpush.bf16.xpose.msra.mxu0 0
    %238 = vmatpush.bf16.xpose.msra.mxu0 0
    %239 = vmatpush.bf16.xpose.msra.mxu0 0
    %240 = vmatpush.bf16.xpose.msra.mxu0 0
    %241 = vmatpush.bf16.xpose.msra.mxu0 0
    %242 = vmatpush.bf16.xpose.msra.mxu0 0
    %243 = vmatpush.bf16.xpose.msra.mxu0 %v235
    %244 = vmatpush.bf16.xpose.msra.mxu0 %v232
    %245 = vmatmul.bf16.gmra.mxu0 %v229
    %v246 = vpop.f32.mrf.mxu0
    %v247 = vadd.f32 %v226, %v246
    %v248 = vpop.f32.mrf.mxu0
    %249 = vdwg.mxu0
    %v258 = vunpack.c.l.b16 %v102
    %v259 = vunpack.c.l.b16 %v103
    %v260 = vunpack.c.l.b16 %v104
    %v261 = vunpack.c.l.b16 %v105
    %v262 = vunpack.c.l.b16 %v106
    %v263 = vunpack.c.l.b16 %v107
    %v264 = vunpack.c.l.b16 %v108
    %v265 = vunpack.c.l.b16 %v109
    %v266 = vrot.slane %v259, 7
    %v267 = vsel %vm130, %v266, %v258
    %v268 = vrot.slane %v260, 6
    %v269 = vsel %vm133, %v268, %v267
    %v270 = vrot.slane %v261, 5
    %v271 = vsel %vm136, %v270, %v269
    %v272 = vrot.slane %v262, 4
    %v273 = vsel %vm139, %v272, %v271
    %v274 = vrot.slane %v263, 3
    %v275 = vsel %vm142, %v274, %v273
    %v276 = vrot.slane %v264, 2
    %v277 = vsel %vm145, %v276, %v275
    %v278 = vrot.slane %v265, 1
    %v279 = vsel %vm148, %v278, %v277
    %v280 = vpack.c.b16 %v279, %v279
    %v285 = vunpack.c.l.b16 %v48
    %v286 = vunpack.c.l.b16 %v49
    %v287 = vunpack.c.l.b16 %v50
    %v288 = vunpack.c.l.b16 %v51
    %v289 = vpack.c.b16 %v286, %v285
    %v290 = vpack.c.b16 %v288, %v287
    %291 = vrot.lane.b32.xlu0 %v111, 64
    %v292 = vpop.permute.xlu0 %291
    %v295 = vsel %vm161, %v280, 0
    %v298 = vsel %vm161, %v289, 0
    %v301 = vsel %vm161, %v290, 0
    %303 = vmatpush.bf16.xpose.msra.mxu0 0
    %304 = vmatpush.bf16.xpose.msra.mxu0 0
    %305 = vmatpush.bf16.xpose.msra.mxu0 0
    %306 = vmatpush.bf16.xpose.msra.mxu0 0
    %307 = vmatpush.bf16.xpose.msra.mxu0 0
    %308 = vmatpush.bf16.xpose.msra.mxu0 0
    %309 = vmatpush.bf16.xpose.msra.mxu0 %v301
    %310 = vmatpush.bf16.xpose.msra.mxu0 %v298
    %311 = vmatmul.bf16.gmra.mxu0 %v295
    %v312 = vpop.f32.mrf.mxu0
    %v313 = vadd.f32 %v292, %v312
    %v314 = vpop.f32.mrf.mxu0
    %315 = vdwg.mxu0
    %v316 = vpack.c.bf16 %v181, %v181
    %v317 = vpack.c.bf16 %v247, %v247
    %v318 = vpack.c.bf16 %v313, %v313
    %vm319 = vcmask 64512
    %v321 = vsel %vm319, %v316, 0
    %v324 = vsel %vm319, %v317, 0
    %326 = vmatpush.bf16.xpose.msra.mxu0 0
    %327 = vmatpush.bf16.xpose.msra.mxu0 0
    %328 = vmatpush.bf16.xpose.msra.mxu0 0
    %329 = vmatpush.bf16.xpose.msra.mxu0 0
    %330 = vmatpush.bf16.xpose.msra.mxu0 0
    %331 = vmatpush.bf16.xpose.msra.mxu0 0
    %332 = vmatpush.bf16.xpose.msra.mxu0 0
    %333 = vmatpush.bf16.xpose.msra.mxu0 %v324
    %334 = vmatmul.bf16.gmra.mxu0 %v321
    %v335 = vpop.f32.mrf.mxu0
    %v336 = vadd.f32 0.0, %v335
    %v337 = vpop.f32.mrf.mxu0
    %338 = vdwg.mxu0
    %v339 = vsel %vm319, %v336, -inf
    %340 = vmax.xlane.f32.xlu0 %v339
    %v341 = vpop.xlane.xlu0 %340
    %v342 = vsub.f32 %v336, %v341
    %v343 = vmul.f32 %v342, 1.442695
    %v344 = vpow.pop %v343
    %v345 = vsel %vm319, %v344, 0.0
    %346 = vadd.xlane.f32.xlu0 %v345
    %v347 = vpop.xlane.xlu0 %346
    %v348 = vrcp.pop %v347
    %v349 = vmul.f32 %v347, %v348
    %v350 = vsub.f32 1.0, %v349
    %v351 = vmul.f32 %v348, %v350
    %v352 = vadd.f32 %v348, %v351
    %vm353 = vweird.f32 %v347
    %vm354 = vweird.f32 %v348
    %vm355 = vmor %vm353, %vm354
    %v356 = vsel %vm355, %v348, %v352
    %v357 = vand.u32 2147483647, %v347
    %vm358 = vcmp.eq.f32.partialorder %v357, 8.507059e+37
    %v359 = vand.u32 %v347, 2147483648
    %v360 = vor.u32 1.1754944e-38, %v359
    %v361 = vsel %vm358, %v360, %v356
    %v362 = vmul.f32 %v344, %v361
    %v363 = vpack.c.bf16 %v362, %v362
    %v365 = vsel %vm319, %v363, 0
    %vm367 = vcmask 1043456
    %v369 = vsel %vm367, %v318, 0
    %371 = vmatpush.bf16.msra.mxu0 0
    %372 = vmatpush.bf16.msra.mxu0 0
    %373 = vmatpush.bf16.msra.mxu0 0
    %374 = vmatpush.bf16.msra.mxu0 0
    %375 = vmatpush.bf16.msra.mxu0 0
    %376 = vmatpush.bf16.msra.mxu0 0
    %377 = vmatpush.bf16.msra.mxu0 0
    %378 = vmatpush.bf16.msra.mxu0 %v369
    %379 = vmatmul.bf16.gmra.mxu0 %v365
    %v380 = vpop.f32.mrf.mxu0
    %v381 = vadd.f32 0.0, %v380
    %v382 = vpop.f32.mrf.mxu0
    %383 = vdwg.mxu0
    %v384 = vpack.c.bf16 %v381, %v381
    %v386 = vunpack.c.l.b16 %v316
    %v387 = vpack.c.b16 %v386, %v386
    %388 = vrot.lane.b32.xlu0 %v387, 120
    %v389 = vpop.permute.xlu0 %388
    %v391 = vunpack.c.l.b16 %v317
    %v392 = vpack.c.b16 %v391, %v391
    %393 = vrot.lane.b32.xlu0 %v392, 120
    %v394 = vpop.permute.xlu0 %393
    %v396 = vsel %vm319, %v389, 0
    %v399 = vsel %vm319, %v394, 0
    %401 = vmatpush.bf16.xpose.msra.mxu0 0
    %402 = vmatpush.bf16.xpose.msra.mxu0 0
    %403 = vmatpush.bf16.xpose.msra.mxu0 0
    %404 = vmatpush.bf16.xpose.msra.mxu0 0
    %405 = vmatpush.bf16.xpose.msra.mxu0 0
    %406 = vmatpush.bf16.xpose.msra.mxu0 0
    %407 = vmatpush.bf16.xpose.msra.mxu0 0
    %408 = vmatpush.bf16.xpose.msra.mxu0 %v399
    %409 = vmatmul.bf16.gmra.mxu0 %v396
    %v410 = vpop.f32.mrf.mxu0
    %v411 = vadd.f32 0.0, %v410
    %v412 = vpop.f32.mrf.mxu0
    %413 = vdwg.mxu0
    %v414 = vsel %vm319, %v411, -inf
    %415 = vmax.xlane.f32.xlu0 %v414
    %v416 = vpop.xlane.xlu0 %415
    %v417 = vsub.f32 %v411, %v416
    %v418 = vmul.f32 %v417, 1.442695
    %v419 = vpow.pop %v418
    %v420 = vsel %vm319, %v419, 0.0
    %421 = vadd.xlane.f32.xlu0 %v420
    %v422 = vpop.xlane.xlu0 %421
    %v423 = vrcp.pop %v422
    %v424 = vmul.f32 %v422, %v423
    %v425 = vsub.f32 1.0, %v424
    %v426 = vmul.f32 %v423, %v425
    %v427 = vadd.f32 %v423, %v426
    %vm428 = vweird.f32 %v422
    %vm429 = vweird.f32 %v423
    %vm430 = vmor %vm428, %vm429
    %v431 = vsel %vm430, %v423, %v427
    %v432 = vand.u32 2147483647, %v422
    %vm433 = vcmp.eq.f32.partialorder %v432, 8.507059e+37
    %v434 = vand.u32 %v422, 2147483648
    %v435 = vor.u32 1.1754944e-38, %v434
    %v436 = vsel %vm433, %v435, %v431
    %v437 = vmul.f32 %v419, %v436
    %v438 = vpack.c.bf16 %v437, %v437
    %v440 = vunpack.c.l.b16 %v318
    %v441 = vpack.c.b16 %v440, %v440
    %442 = vrot.lane.b32.xlu0 %v441, 120
    %v443 = vpop.permute.xlu0 %442
    %v445 = vsel %vm319, %v438, 0
    %v448 = vsel %vm367, %v443, 0
    %450 = vmatpush.bf16.msra.mxu0 0
    %451 = vmatpush.bf16.msra.mxu0 0
    %452 = vmatpush.bf16.msra.mxu0 0
    %453 = vmatpush.bf16.msra.mxu0 0
    %454 = vmatpush.bf16.msra.mxu0 0
    %455 = vmatpush.bf16.msra.mxu0 0
    %456 = vmatpush.bf16.msra.mxu0 0
    %457 = vmatpush.bf16.msra.mxu0 %v448
    %458 = vmatmul.bf16.gmra.mxu0 %v445
    %v459 = vpop.f32.mrf.mxu0
    %v460 = vadd.f32 0.0, %v459
    %v461 = vpop.f32.mrf.mxu0
    %462 = vdwg.mxu0
    %v463 = vpack.c.bf16 %v460, %v460
    %v468 = vunpack.c.l.b16 %v56
    %v469 = vunpack.c.l.b16 %v57
    %v470 = vunpack.c.l.b16 %v58
    %v471 = vunpack.c.l.b16 %v59
    %v472 = vpack.c.b16 %v469, %v468
    %v473 = vpack.c.b16 %v471, %v470
    %474 = vrot.lane.b32.xlu0 %v472, 120
    %v475 = vpop.permute.xlu0 %474
    %476 = vrot.lane.b32.xlu0 %v473, 120
    %v477 = vpop.permute.xlu0 %476
    %v479 = vsel %vm319, %v463, 0
    %v482 = vsel %vm319, %v475, 0
    %v485 = vsel %vm319, %v477, 0
    %487 = vmatpush.bf16.xpose.msra.mxu0 0
    %488 = vmatpush.bf16.xpose.msra.mxu0 0
    %489 = vmatpush.bf16.xpose.msra.mxu0 0
    %490 = vmatpush.bf16.xpose.msra.mxu0 0
    %491 = vmatpush.bf16.xpose.msra.mxu0 0
    %492 = vmatpush.bf16.xpose.msra.mxu0 0
    %493 = vmatpush.bf16.xpose.msra.mxu0 %v485
    %494 = vmatpush.bf16.xpose.msra.mxu0 %v482
    %495 = vmatmul.bf16.gmra.mxu0 %v479
    %v496 = vpop.f32.mrf.mxu0
    %v497 = vadd.f32 0.0, %v496
    %v498 = vpop.f32.mrf.mxu0
    %499 = vdwg.mxu0
    %v501 = vsel %vm319, %v384, 0
    %v504 = vsel %vm319, %v472, 0
    %v507 = vsel %vm319, %v473, 0
    %509 = vmatpush.bf16.xpose.msra.mxu0 0
    %510 = vmatpush.bf16.xpose.msra.mxu0 0
    %511 = vmatpush.bf16.xpose.msra.mxu0 0
    %512 = vmatpush.bf16.xpose.msra.mxu0 0
    %513 = vmatpush.bf16.xpose.msra.mxu0 0
    %514 = vmatpush.bf16.xpose.msra.mxu0 0
    %515 = vmatpush.bf16.xpose.msra.mxu0 %v507
    %516 = vmatpush.bf16.xpose.msra.mxu0 %v504
    %517 = vmatmul.bf16.gmra.mxu0 %v501
    %v518 = vpop.f32.mrf.mxu0
    %v519 = vadd.f32 %v497, %v518
    %v520 = vpop.f32.mrf.mxu0
    %521 = vdwg.mxu0
    %522 = vrot.lane.b32.xlu0 %v387, 112
    %v523 = vpop.permute.xlu0 %522
    %524 = vrot.lane.b32.xlu0 %v392, 112
    %v525 = vpop.permute.xlu0 %524
    %v527 = vsel %vm319, %v523, 0
    %v530 = vsel %vm319, %v525, 0
    %532 = vmatpush.bf16.xpose.msra.mxu0 0
    %533 = vmatpush.bf16.xpose.msra.mxu0 0
    %534 = vmatpush.bf16.xpose.msra.mxu0 0
    %535 = vmatpush.bf16.xpose.msra.mxu0 0
    %536 = vmatpush.bf16.xpose.msra.mxu0 0
    %537 = vmatpush.bf16.xpose.msra.mxu0 0
    %538 = vmatpush.bf16.xpose.msra.mxu0 0
    %539 = vmatpush.bf16.xpose.msra.mxu0 %v530
    %540 = vmatmul.bf16.gmra.mxu0 %v527
    %v541 = vpop.f32.mrf.mxu0
    %v542 = vadd.f32 0.0, %v541
    %v543 = vpop.f32.mrf.mxu0
    %544 = vdwg.mxu0
    %v545 = vsel %vm319, %v542, -inf
    %546 = vmax.xlane.f32.xlu0 %v545
    %v547 = vpop.xlane.xlu0 %546
    %v548 = vsub.f32 %v542, %v547
    %v549 = vmul.f32 %v548, 1.442695
    %v550 = vpow.pop %v549
    %v551 = vsel %vm319, %v550, 0.0
    %552 = vadd.xlane.f32.xlu0 %v551
    %v553 = vpop.xlane.xlu0 %552
    %v554 = vrcp.pop %v553
    %v555 = vmul.f32 %v553, %v554
    %v556 = vsub.f32 1.0, %v555
    %v557 = vmul.f32 %v554, %v556
    %v558 = vadd.f32 %v554, %v557
    %vm559 = vweird.f32 %v553
    %vm560 = vweird.f32 %v554
    %vm561 = vmor %vm559, %vm560
    %v562 = vsel %vm561, %v554, %v558
    %v563 = vand.u32 2147483647, %v553
    %vm564 = vcmp.eq.f32.partialorder %v563, 8.507059e+37
    %v565 = vand.u32 %v553, 2147483648
    %v566 = vor.u32 1.1754944e-38, %v565
    %v567 = vsel %vm564, %v566, %v562
    %v568 = vmul.f32 %v550, %v567
    %v569 = vpack.c.bf16 %v568, %v568
    %570 = vrot.lane.b32.xlu0 %v441, 112
    %v571 = vpop.permute.xlu0 %570
    %v573 = vsel %vm319, %v569, 0
    %v576 = vsel %vm367, %v571, 0
    %578 = vmatpush.bf16.msra.mxu0 0
    %579 = vmatpush.bf16.msra.mxu0 0
    %580 = vmatpush.bf16.msra.mxu0 0
    %581 = vmatpush.bf16.msra.mxu0 0
    %582 = vmatpush.bf16.msra.mxu0 0
    %583 = vmatpush.bf16.msra.mxu0 0
    %584 = vmatpush.bf16.msra.mxu0 0
    %585 = vmatpush.bf16.msra.mxu0 %v576
    %586 = vmatmul.bf16.gmra.mxu0 %v573
    %v587 = vpop.f32.mrf.mxu0
    %v588 = vadd.f32 0.0, %v587
    %v589 = vpop.f32.mrf.mxu0
    %590 = vdwg.mxu0
    %v591 = vpack.c.bf16 %v588, %v588
    %592 = vrot.lane.b32.xlu0 %v472, 112
    %v593 = vpop.permute.xlu0 %592
    %594 = vrot.lane.b32.xlu0 %v473, 112
    %v595 = vpop.permute.xlu0 %594
    %v597 = vsel %vm319, %v591, 0
    %v600 = vsel %vm319, %v593, 0
    %v603 = vsel %vm319, %v595, 0
    %605 = vmatpush.bf16.xpose.msra.mxu0 0
    %606 = vmatpush.bf16.xpose.msra.mxu0 0
    %607 = vmatpush.bf16.xpose.msra.mxu0 0
    %608 = vmatpush.bf16.xpose.msra.mxu0 0
    %609 = vmatpush.bf16.xpose.msra.mxu0 0
    %610 = vmatpush.bf16.xpose.msra.mxu0 0
    %611 = vmatpush.bf16.xpose.msra.mxu0 %v603
    %612 = vmatpush.bf16.xpose.msra.mxu0 %v600
    %613 = vmatmul.bf16.gmra.mxu0 %v597
    %v614 = vpop.f32.mrf.mxu0
    %v615 = vadd.f32 0.0, %v614
    %v616 = vpop.f32.mrf.mxu0
    %617 = vdwg.mxu0
    %v618 = vadd.f32 %v519, %v615
    %619 = vrot.lane.b32.xlu0 %v387, 104
    %v620 = vpop.permute.xlu0 %619
    %621 = vrot.lane.b32.xlu0 %v392, 104
    %v622 = vpop.permute.xlu0 %621
    %v624 = vsel %vm319, %v620, 0
    %v627 = vsel %vm319, %v622, 0
    %629 = vmatpush.bf16.xpose.msra.mxu0 0
    %630 = vmatpush.bf16.xpose.msra.mxu0 0
    %631 = vmatpush.bf16.xpose.msra.mxu0 0
    %632 = vmatpush.bf16.xpose.msra.mxu0 0
    %633 = vmatpush.bf16.xpose.msra.mxu0 0
    %634 = vmatpush.bf16.xpose.msra.mxu0 0
    %635 = vmatpush.bf16.xpose.msra.mxu0 0
    %636 = vmatpush.bf16.xpose.msra.mxu0 %v627
    %637 = vmatmul.bf16.gmra.mxu0 %v624
    %v638 = vpop.f32.mrf.mxu0
    %v639 = vadd.f32 0.0, %v638
    %v640 = vpop.f32.mrf.mxu0
    %641 = vdwg.mxu0
    %v642 = vsel %vm319, %v639, -inf
    %643 = vmax.xlane.f32.xlu0 %v642
    %v644 = vpop.xlane.xlu0 %643
    %v645 = vsub.f32 %v639, %v644
    %v646 = vmul.f32 %v645, 1.442695
    %v647 = vpow.pop %v646
    %v648 = vsel %vm319, %v647, 0.0
    %649 = vadd.xlane.f32.xlu0 %v648
    %v650 = vpop.xlane.xlu0 %649
    %v651 = vrcp.pop %v650
    %v652 = vmul.f32 %v650, %v651
    %v653 = vsub.f32 1.0, %v652
    %v654 = vmul.f32 %v651, %v653
    %v655 = vadd.f32 %v651, %v654
    %vm656 = vweird.f32 %v650
    %vm657 = vweird.f32 %v651
    %vm658 = vmor %vm656, %vm657
    %v659 = vsel %vm658, %v651, %v655
    %v660 = vand.u32 2147483647, %v650
    %vm661 = vcmp.eq.f32.partialorder %v660, 8.507059e+37
    %v662 = vand.u32 %v650, 2147483648
    %v663 = vor.u32 1.1754944e-38, %v662
    %v664 = vsel %vm661, %v663, %v659
    %v665 = vmul.f32 %v647, %v664
    %v666 = vpack.c.bf16 %v665, %v665
    %667 = vrot.lane.b32.xlu0 %v441, 104
    %v668 = vpop.permute.xlu0 %667
    %v670 = vsel %vm319, %v666, 0
    %v673 = vsel %vm367, %v668, 0
    %675 = vmatpush.bf16.msra.mxu0 0
    %676 = vmatpush.bf16.msra.mxu0 0
    %677 = vmatpush.bf16.msra.mxu0 0
    %678 = vmatpush.bf16.msra.mxu0 0
    %679 = vmatpush.bf16.msra.mxu0 0
    %680 = vmatpush.bf16.msra.mxu0 0
    %681 = vmatpush.bf16.msra.mxu0 0
    %682 = vmatpush.bf16.msra.mxu0 %v673
    %683 = vmatmul.bf16.gmra.mxu0 %v670
    %v684 = vpop.f32.mrf.mxu0
    %v685 = vadd.f32 0.0, %v684
    %v686 = vpop.f32.mrf.mxu0
    %687 = vdwg.mxu0
    %v688 = vpack.c.bf16 %v685, %v685
    %689 = vrot.lane.b32.xlu0 %v472, 104
    %v690 = vpop.permute.xlu0 %689
    %691 = vrot.lane.b32.xlu0 %v473, 104
    %v692 = vpop.permute.xlu0 %691
    %v694 = vsel %vm319, %v688, 0
    %v697 = vsel %vm319, %v690, 0
    %v700 = vsel %vm319, %v692, 0
    %702 = vmatpush.bf16.xpose.msra.mxu0 0
    %703 = vmatpush.bf16.xpose.msra.mxu0 0
    %704 = vmatpush.bf16.xpose.msra.mxu0 0
    %705 = vmatpush.bf16.xpose.msra.mxu0 0
    %706 = vmatpush.bf16.xpose.msra.mxu0 0
    %707 = vmatpush.bf16.xpose.msra.mxu0 0
    %708 = vmatpush.bf16.xpose.msra.mxu0 %v700
    %709 = vmatpush.bf16.xpose.msra.mxu0 %v697
    %710 = vmatmul.bf16.gmra.mxu0 %v694
    %v711 = vpop.f32.mrf.mxu0
    %v712 = vadd.f32 0.0, %v711
    %v713 = vpop.f32.mrf.mxu0
    %714 = vdwg.mxu0
    %v715 = vadd.f32 %v618, %v712
    %v717 = vperm.slane %v61, 0
    %v719 = vadd.f32 %v715, %v717
    %v721 = vrot.slane %v719, 1
    %v722 = vrot.slane %v719, 2
    %v723 = vrot.slane %v719, 3
    %v724 = vrot.slane %v719, 4
    %v725 = vrot.slane %v719, 5
    %v726 = vrot.slane %v719, 6
    %v727 = vrot.slane %v719, 7
    %vm735 = vcmask 253952
    %736 = vst.msk [vmem:[#allocation2] sm:$0x1] %vm735, %v719
    %737 = vst.msk [vmem:[#allocation2 + $0x2] sm:$0x1] %vm735, %v721
    %738 = vst.msk [vmem:[#allocation2 + $0x4] sm:$0x1] %vm735, %v722
    %739 = vst.msk [vmem:[#allocation2 + $0x6] sm:$0x1] %vm735, %v723
    %740 = vst.msk [vmem:[#allocation2 + $0x8] sm:$0x1] %vm735, %v724
    %741 = vst.msk [vmem:[#allocation2 + $0xa] sm:$0x1] %vm735, %v725
    %742 = vst.msk [vmem:[#allocation2 + $0xc] sm:$0x1] %vm735, %v726
    %743 = vst.msk [vmem:[#allocation2 + $0xe] sm:$0x1] %vm735, %v727
    %v744 = vld [vmem:[%s0 + $0x1] sm:$0x1]
    %v745 = vld [vmem:[%s0 + $0x3] sm:$0x1]
    %v746 = vld [vmem:[%s0 + $0x5] sm:$0x1]
    %v747 = vld [vmem:[%s0 + $0x7] sm:$0x1]
    %v748 = vld [vmem:[%s0 + $0x9] sm:$0x1]
    %v749 = vld [vmem:[%s0 + $0xb] sm:$0x1]
    %v750 = vld [vmem:[%s0 + $0xd] sm:$0x1]
    %v751 = vld [vmem:[%s0 + $0xf] sm:$0x1]
    %v752 = vpack.c.bf16 %v744, %v744
    %v753 = vpack.c.bf16 %v745, %v745
    %v754 = vpack.c.bf16 %v746, %v746
    %v755 = vpack.c.bf16 %v747, %v747
    %v756 = vpack.c.bf16 %v748, %v748
    %v757 = vpack.c.bf16 %v749, %v749
    %v758 = vpack.c.bf16 %v750, %v750
    %v759 = vpack.c.bf16 %v751, %v751
    %v760 = vld [vmem:[%s1 + $0x1] sm:$0x1]
    %v761 = vld [vmem:[%s1 + $0x3] sm:$0x1]
    %v762 = vld [vmem:[%s1 + $0x5] sm:$0x1]
    %v763 = vld [vmem:[%s1 + $0x7] sm:$0x1]
    %v764 = vld [vmem:[%s1 + $0x9] sm:$0x1]
    %v765 = vld [vmem:[%s1 + $0xb] sm:$0x1]
    %v766 = vld [vmem:[%s1 + $0xd] sm:$0x1]
    %v767 = vld [vmem:[%s1 + $0xf] sm:$0x1]
    %v768 = vpack.c.bf16 %v760, %v760
    %v769 = vpack.c.bf16 %v761, %v761
    %v770 = vpack.c.bf16 %v762, %v762
    %v771 = vpack.c.bf16 %v763, %v763
    %v772 = vpack.c.bf16 %v764, %v764
    %v773 = vpack.c.bf16 %v765, %v765
    %v774 = vpack.c.bf16 %v766, %v766
    %v775 = vpack.c.bf16 %v767, %v767
    %v776 = vld [vmem:[%s2 + $0x1] sm:$0x1]
    %v777 = vld [vmem:[%s2 + $0x3] sm:$0x1]
    %v778 = vld [vmem:[%s2 + $0x5] sm:$0x1]
    %v779 = vld [vmem:[%s2 + $0x7] sm:$0x1]
    %v780 = vld [vmem:[%s2 + $0x9] sm:$0x1]
    %v781 = vld [vmem:[%s2 + $0xb] sm:$0x1]
    %v782 = vld [vmem:[%s2 + $0xd] sm:$0x1]
    %v783 = vld [vmem:[%s2 + $0xf] sm:$0x1]
    %v784 = vpack.c.bf16 %v776, %v776
    %v785 = vpack.c.bf16 %v777, %v777
    %v786 = vpack.c.bf16 %v778, %v778
    %v787 = vpack.c.bf16 %v779, %v779
    %v788 = vpack.c.bf16 %v780, %v780
    %v789 = vpack.c.bf16 %v781, %v781
    %v790 = vpack.c.bf16 %v782, %v782
    %v791 = vpack.c.bf16 %v783, %v783
    %v800 = vunpack.c.l.b16 %v752
    %v801 = vunpack.c.l.b16 %v753
    %v802 = vunpack.c.l.b16 %v754
    %v803 = vunpack.c.l.b16 %v755
    %v804 = vunpack.c.l.b16 %v756
    %v805 = vunpack.c.l.b16 %v757
    %v806 = vunpack.c.l.b16 %v758
    %v807 = vunpack.c.l.b16 %v759
    %v808 = vrot.slane %v801, 7
    %v809 = vsel %vm130, %v808, %v800
    %v810 = vrot.slane %v802, 6
    %v811 = vsel %vm133, %v810, %v809
    %v812 = vrot.slane %v803, 5
    %v813 = vsel %vm136, %v812, %v811
    %v814 = vrot.slane %v804, 4
    %v815 = vsel %vm139, %v814, %v813
    %v816 = vrot.slane %v805, 3
    %v817 = vsel %vm142, %v816, %v815
    %v818 = vrot.slane %v806, 2
    %v819 = vsel %vm145, %v818, %v817
    %v820 = vrot.slane %v807, 1
    %v821 = vsel %vm148, %v820, %v819
    %v822 = vpack.c.b16 %v821, %v821
    %v824 = vsel %vm161, %v822, 0
    %826 = vmatpush.bf16.xpose.msra.mxu0 0
    %827 = vmatpush.bf16.xpose.msra.mxu0 0
    %828 = vmatpush.bf16.xpose.msra.mxu0 0
    %829 = vmatpush.bf16.xpose.msra.mxu0 0
    %830 = vmatpush.bf16.xpose.msra.mxu0 0
    %831 = vmatpush.bf16.xpose.msra.mxu0 0
    %832 = vmatpush.bf16.xpose.msra.mxu0 %v169
    %833 = vmatpush.bf16.xpose.msra.mxu0 %v166
    %834 = vmatmul.bf16.gmra.mxu0 %v824
    %v835 = vpop.f32.mrf.mxu0
    %v836 = vadd.f32 %v111, %v835
    %v837 = vpop.f32.mrf.mxu0
    %838 = vdwg.mxu0
    %v847 = vunpack.c.l.b16 %v768
    %v848 = vunpack.c.l.b16 %v769
    %v849 = vunpack.c.l.b16 %v770
    %v850 = vunpack.c.l.b16 %v771
    %v851 = vunpack.c.l.b16 %v772
    %v852 = vunpack.c.l.b16 %v773
    %v853 = vunpack.c.l.b16 %v774
    %v854 = vunpack.c.l.b16 %v775
    %v855 = vrot.slane %v848, 7
    %v856 = vsel %vm130, %v855, %v847
    %v857 = vrot.slane %v849, 6
    %v858 = vsel %vm133, %v857, %v856
    %v859 = vrot.slane %v850, 5
    %v860 = vsel %vm136, %v859, %v858
    %v861 = vrot.slane %v851, 4
    %v862 = vsel %vm139, %v861, %v860
    %v863 = vrot.slane %v852, 3
    %v864 = vsel %vm142, %v863, %v862
    %v865 = vrot.slane %v853, 2
    %v866 = vsel %vm145, %v865, %v864
    %v867 = vrot.slane %v854, 1
    %v868 = vsel %vm148, %v867, %v866
    %v869 = vpack.c.b16 %v868, %v868
    %v871 = vsel %vm161, %v869, 0
    %873 = vmatpush.bf16.xpose.msra.mxu0 0
    %874 = vmatpush.bf16.xpose.msra.mxu0 0
    %875 = vmatpush.bf16.xpose.msra.mxu0 0
    %876 = vmatpush.bf16.xpose.msra.mxu0 0
    %877 = vmatpush.bf16.xpose.msra.mxu0 0
    %878 = vmatpush.bf16.xpose.msra.mxu0 0
    %879 = vmatpush.bf16.xpose.msra.mxu0 %v235
    %880 = vmatpush.bf16.xpose.msra.mxu0 %v232
    %881 = vmatmul.bf16.gmra.mxu0 %v871
    %v882 = vpop.f32.mrf.mxu0
    %v883 = vadd.f32 %v226, %v882
    %v884 = vpop.f32.mrf.mxu0
    %885 = vdwg.mxu0
    %v894 = vunpack.c.l.b16 %v784
    %v895 = vunpack.c.l.b16 %v785
    %v896 = vunpack.c.l.b16 %v786
    %v897 = vunpack.c.l.b16 %v787
    %v898 = vunpack.c.l.b16 %v788
    %v899 = vunpack.c.l.b16 %v789
    %v900 = vunpack.c.l.b16 %v790
    %v901 = vunpack.c.l.b16 %v791
    %v902 = vrot.slane %v895, 7
    %v903 = vsel %vm130, %v902, %v894
    %v904 = vrot.slane %v896, 6
    %v905 = vsel %vm133, %v904, %v903
    %v906 = vrot.slane %v897, 5
    %v907 = vsel %vm136, %v906, %v905
    %v908 = vrot.slane %v898, 4
    %v909 = vsel %vm139, %v908, %v907
    %v910 = vrot.slane %v899, 3
    %v911 = vsel %vm142, %v910, %v909
    %v912 = vrot.slane %v900, 2
    %v913 = vsel %vm145, %v912, %v911
    %v914 = vrot.slane %v901, 1
    %v915 = vsel %vm148, %v914, %v913
    %v916 = vpack.c.b16 %v915, %v915
    %v918 = vsel %vm161, %v916, 0
    %920 = vmatpush.bf16.xpose.msra.mxu0 0
    %921 = vmatpush.bf16.xpose.msra.mxu0 0
    %922 = vmatpush.bf16.xpose.msra.mxu0 0
    %923 = vmatpush.bf16.xpose.msra.mxu0 0
    %924 = vmatpush.bf16.xpose.msra.mxu0 0
    %925 = vmatpush.bf16.xpose.msra.mxu0 0
    %926 = vmatpush.bf16.xpose.msra.mxu0 %v301
    %927 = vmatpush.bf16.xpose.msra.mxu0 %v298
    %928 = vmatmul.bf16.gmra.mxu0 %v918
    %v929 = vpop.f32.mrf.mxu0
    %v930 = vadd.f32 %v292, %v929
    %v931 = vpop.f32.mrf.mxu0
    %932 = vdwg.mxu0
    %v933 = vpack.c.bf16 %v836, %v836
    %v934 = vpack.c.bf16 %v883, %v883
    %v935 = vpack.c.bf16 %v930, %v930
    %v937 = vsel %vm319, %v933, 0
    %v940 = vsel %vm319, %v934, 0
    %942 = vmatpush.bf16.xpose.msra.mxu0 0
    %943 = vmatpush.bf16.xpose.msra.mxu0 0
    %944 = vmatpush.bf16.xpose.msra.mxu0 0
    %945 = vmatpush.bf16.xpose.msra.mxu0 0
    %946 = vmatpush.bf16.xpose.msra.mxu0 0
    %947 = vmatpush.bf16.xpose.msra.mxu0 0
    %948 = vmatpush.bf16.xpose.msra.mxu0 0
    %949 = vmatpush.bf16.xpose.msra.mxu0 %v940
    %950 = vmatmul.bf16.gmra.mxu0 %v937
    %v951 = vpop.f32.mrf.mxu0
    %v952 = vadd.f32 0.0, %v951
    %v953 = vpop.f32.mrf.mxu0
    %954 = vdwg.mxu0
    %v955 = vsel %vm319, %v952, -inf
    %956 = vmax.xlane.f32.xlu0 %v955
    %v957 = vpop.xlane.xlu0 %956
    %v958 = vsub.f32 %v952, %v957
    %v959 = vmul.f32 %v958, 1.442695
    %v960 = vpow.pop %v959
    %v961 = vsel %vm319, %v960, 0.0
    %962 = vadd.xlane.f32.xlu0 %v961
    %v963 = vpop.xlane.xlu0 %962
    %v964 = vrcp.pop %v963
    %v965 = vmul.f32 %v963, %v964
    %v966 = vsub.f32 1.0, %v965
    %v967 = vmul.f32 %v964, %v966
    %v968 = vadd.f32 %v964, %v967
    %vm969 = vweird.f32 %v963
    %vm970 = vweird.f32 %v964
    %vm971 = vmor %vm969, %vm970
    %v972 = vsel %vm971, %v964, %v968
    %v973 = vand.u32 2147483647, %v963
    %vm974 = vcmp.eq.f32.partialorder %v973, 8.507059e+37
    %v975 = vand.u32 %v963, 2147483648
    %v976 = vor.u32 1.1754944e-38, %v975
    %v977 = vsel %vm974, %v976, %v972
    %v978 = vmul.f32 %v960, %v977
    %v979 = vpack.c.bf16 %v978, %v978
    %v981 = vsel %vm319, %v979, 0
    %v984 = vsel %vm367, %v935, 0
    %986 = vmatpush.bf16.msra.mxu0 0
    %987 = vmatpush.bf16.msra.mxu0 0
    %988 = vmatpush.bf16.msra.mxu0 0
    %989 = vmatpush.bf16.msra.mxu0 0
    %990 = vmatpush.bf16.msra.mxu0 0
    %991 = vmatpush.bf16.msra.mxu0 0
    %992 = vmatpush.bf16.msra.mxu0 0
    %993 = vmatpush.bf16.msra.mxu0 %v984
    %994 = vmatmul.bf16.gmra.mxu0 %v981
    %v995 = vpop.f32.mrf.mxu0
    %v996 = vadd.f32 0.0, %v995
    %v997 = vpop.f32.mrf.mxu0
    %998 = vdwg.mxu0
    %v999 = vpack.c.bf16 %v996, %v996
    %v1001 = vunpack.c.l.b16 %v933
    %v1002 = vpack.c.b16 %v1001, %v1001
    %1003 = vrot.lane.b32.xlu0 %v1002, 120
    %v1004 = vpop.permute.xlu0 %1003
    %v1006 = vunpack.c.l.b16 %v934
    %v1007 = vpack.c.b16 %v1006, %v1006
    %1008 = vrot.lane.b32.xlu0 %v1007, 120
    %v1009 = vpop.permute.xlu0 %1008
    %v1011 = vsel %vm319, %v1004, 0
    %v1014 = vsel %vm319, %v1009, 0
    %1016 = vmatpush.bf16.xpose.msra.mxu0 0
    %1017 = vmatpush.bf16.xpose.msra.mxu0 0
    %1018 = vmatpush.bf16.xpose.msra.mxu0 0
    %1019 = vmatpush.bf16.xpose.msra.mxu0 0
    %1020 = vmatpush.bf16.xpose.msra.mxu0 0
    %1021 = vmatpush.bf16.xpose.msra.mxu0 0
    %1022 = vmatpush.bf16.xpose.msra.mxu0 0
    %1023 = vmatpush.bf16.xpose.msra.mxu0 %v1014
    %1024 = vmatmul.bf16.gmra.mxu0 %v1011
    %v1025 = vpop.f32.mrf.mxu0
    %v1026 = vadd.f32 0.0, %v1025
    %v1027 = vpop.f32.mrf.mxu0
    %1028 = vdwg.mxu0
    %v1029 = vsel %vm319, %v1026, -inf
    %1030 = vmax.xlane.f32.xlu0 %v1029
    %v1031 = vpop.xlane.xlu0 %1030
    %v1032 = vsub.f32 %v1026, %v1031
    %v1033 = vmul.f32 %v1032, 1.442695
    %v1034 = vpow.pop %v1033
    %v1035 = vsel %vm319, %v1034, 0.0
    %1036 = vadd.xlane.f32.xlu0 %v1035
    %v1037 = vpop.xlane.xlu0 %1036
    %v1038 = vrcp.pop %v1037
    %v1039 = vmul.f32 %v1037, %v1038
    %v1040 = vsub.f32 1.0, %v1039
    %v1041 = vmul.f32 %v1038, %v1040
    %v1042 = vadd.f32 %v1038, %v1041
    %vm1043 = vweird.f32 %v1037
    %vm1044 = vweird.f32 %v1038
    %vm1045 = vmor %vm1043, %vm1044
    %v1046 = vsel %vm1045, %v1038, %v1042
    %v1047 = vand.u32 2147483647, %v1037
    %vm1048 = vcmp.eq.f32.partialorder %v1047, 8.507059e+37
    %v1049 = vand.u32 %v1037, 2147483648
    %v1050 = vor.u32 1.1754944e-38, %v1049
    %v1051 = vsel %vm1048, %v1050, %v1046
    %v1052 = vmul.f32 %v1034, %v1051
    %v1053 = vpack.c.bf16 %v1052, %v1052
    %v1055 = vunpack.c.l.b16 %v935
    %v1056 = vpack.c.b16 %v1055, %v1055
    %1057 = vrot.lane.b32.xlu0 %v1056, 120
    %v1058 = vpop.permute.xlu0 %1057
    %v1060 = vsel %vm319, %v1053, 0
    %v1063 = vsel %vm367, %v1058, 0
    %1065 = vmatpush.bf16.msra.mxu0 0
    %1066 = vmatpush.bf16.msra.mxu0 0
    %1067 = vmatpush.bf16.msra.mxu0 0
    %1068 = vmatpush.bf16.msra.mxu0 0
    %1069 = vmatpush.bf16.msra.mxu0 0
    %1070 = vmatpush.bf16.msra.mxu0 0
    %1071 = vmatpush.bf16.msra.mxu0 0
    %1072 = vmatpush.bf16.msra.mxu0 %v1063
    %1073 = vmatmul.bf16.gmra.mxu0 %v1060
    %v1074 = vpop.f32.mrf.mxu0
    %v1075 = vadd.f32 0.0, %v1074
    %v1076 = vpop.f32.mrf.mxu0
    %1077 = vdwg.mxu0
    %v1078 = vpack.c.bf16 %v1075, %v1075
    %v1080 = vsel %vm319, %v1078, 0
    %1082 = vmatpush.bf16.xpose.msra.mxu0 0
    %1083 = vmatpush.bf16.xpose.msra.mxu0 0
    %1084 = vmatpush.bf16.xpose.msra.mxu0 0
    %1085 = vmatpush.bf16.xpose.msra.mxu0 0
    %1086 = vmatpush.bf16.xpose.msra.mxu0 0
    %1087 = vmatpush.bf16.xpose.msra.mxu0 0
    %1088 = vmatpush.bf16.xpose.msra.mxu0 %v485
    %1089 = vmatpush.bf16.xpose.msra.mxu0 %v482
    %1090 = vmatmul.bf16.gmra.mxu0 %v1080
    %v1091 = vpop.f32.mrf.mxu0
    %v1092 = vadd.f32 0.0, %v1091
    %v1093 = vpop.f32.mrf.mxu0
    %1094 = vdwg.mxu0
    %v1096 = vsel %vm319, %v999, 0
    %1098 = vmatpush.bf16.xpose.msra.mxu0 0
    %1099 = vmatpush.bf16.xpose.msra.mxu0 0
    %1100 = vmatpush.bf16.xpose.msra.mxu0 0
    %1101 = vmatpush.bf16.xpose.msra.mxu0 0
    %1102 = vmatpush.bf16.xpose.msra.mxu0 0
    %1103 = vmatpush.bf16.xpose.msra.mxu0 0
    %1104 = vmatpush.bf16.xpose.msra.mxu0 %v507
    %1105 = vmatpush.bf16.xpose.msra.mxu0 %v504
    %1106 = vmatmul.bf16.gmra.mxu0 %v1096
    %v1107 = vpop.f32.mrf.mxu0
    %v1108 = vadd.f32 %v1092, %v1107
    %v1109 = vpop.f32.mrf.mxu0
    %1110 = vdwg.mxu0
    %1111 = vrot.lane.b32.xlu0 %v1002, 112
    %v1112 = vpop.permute.xlu0 %1111
    %1113 = vrot.lane.b32.xlu0 %v1007, 112
    %v1114 = vpop.permute.xlu0 %1113
    %v1116 = vsel %vm319, %v1112, 0
    %v1119 = vsel %vm319, %v1114, 0
    %1121 = vmatpush.bf16.xpose.msra.mxu0 0
    %1122 = vmatpush.bf16.xpose.msra.mxu0 0
    %1123 = vmatpush.bf16.xpose.msra.mxu0 0
    %1124 = vmatpush.bf16.xpose.msra.mxu0 0
    %1125 = vmatpush.bf16.xpose.msra.mxu0 0
    %1126 = vmatpush.bf16.xpose.msra.mxu0 0
    %1127 = vmatpush.bf16.xpose.msra.mxu0 0
    %1128 = vmatpush.bf16.xpose.msra.mxu0 %v1119
    %1129 = vmatmul.bf16.gmra.mxu0 %v1116
    %v1130 = vpop.f32.mrf.mxu0
    %v1131 = vadd.f32 0.0, %v1130
    %v1132 = vpop.f32.mrf.mxu0
    %1133 = vdwg.mxu0
    %v1134 = vsel %vm319, %v1131, -inf
    %1135 = vmax.xlane.f32.xlu0 %v1134
    %v1136 = vpop.xlane.xlu0 %1135
    %v1137 = vsub.f32 %v1131, %v1136
    %v1138 = vmul.f32 %v1137, 1.442695
    %v1139 = vpow.pop %v1138
    %v1140 = vsel %vm319, %v1139, 0.0
    %1141 = vadd.xlane.f32.xlu0 %v1140
    %v1142 = vpop.xlane.xlu0 %1141
    %v1143 = vrcp.pop %v1142
    %v1144 = vmul.f32 %v1142, %v1143
    %v1145 = vsub.f32 1.0, %v1144
    %v1146 = vmul.f32 %v1143, %v1145
    %v1147 = vadd.f32 %v1143, %v1146
    %vm1148 = vweird.f32 %v1142
    %vm1149 = vweird.f32 %v1143
    %vm1150 = vmor %vm1148, %vm1149
    %v1151 = vsel %vm1150, %v1143, %v1147
    %v1152 = vand.u32 2147483647, %v1142
    %vm1153 = vcmp.eq.f32.partialorder %v1152, 8.507059e+37
    %v1154 = vand.u32 %v1142, 2147483648
    %v1155 = vor.u32 1.1754944e-38, %v1154
    %v1156 = vsel %vm1153, %v1155, %v1151
    %v1157 = vmul.f32 %v1139, %v1156
    %v1158 = vpack.c.bf16 %v1157, %v1157
    %1159 = vrot.lane.b32.xlu0 %v1056, 112
    %v1160 = vpop.permute.xlu0 %1159
    %v1162 = vsel %vm319, %v1158, 0
    %v1165 = vsel %vm367, %v1160, 0
    %1167 = vmatpush.bf16.msra.mxu0 0
    %1168 = vmatpush.bf16.msra.mxu0 0
    %1169 = vmatpush.bf16.msra.mxu0 0
    %1170 = vmatpush.bf16.msra.mxu0 0
    %1171 = vmatpush.bf16.msra.mxu0 0
    %1172 = vmatpush.bf16.msra.mxu0 0
    %1173 = vmatpush.bf16.msra.mxu0 0
    %1174 = vmatpush.bf16.msra.mxu0 %v1165
    %1175 = vmatmul.bf16.gmra.mxu0 %v1162
    %v1176 = vpop.f32.mrf.mxu0
    %v1177 = vadd.f32 0.0, %v1176
    %v1178 = vpop.f32.mrf.mxu0
    %1179 = vdwg.mxu0
    %v1180 = vpack.c.bf16 %v1177, %v1177
    %v1182 = vsel %vm319, %v1180, 0
    %1184 = vmatpush.bf16.xpose.msra.mxu0 0
    %1185 = vmatpush.bf16.xpose.msra.mxu0 0
    %1186 = vmatpush.bf16.xpose.msra.mxu0 0
    %1187 = vmatpush.bf16.xpose.msra.mxu0 0
    %1188 = vmatpush.bf16.xpose.msra.mxu0 0
    %1189 = vmatpush.bf16.xpose.msra.mxu0 0
    %1190 = vmatpush.bf16.xpose.msra.mxu0 %v603
    %1191 = vmatpush.bf16.xpose.msra.mxu0 %v600
    %1192 = vmatmul.bf16.gmra.mxu0 %v1182
    %v1193 = vpop.f32.mrf.mxu0
    %v1194 = vadd.f32 0.0, %v1193
    %v1195 = vpop.f32.mrf.mxu0
    %1196 = vdwg.mxu0
    %v1197 = vadd.f32 %v1108, %v1194
    %1198 = vrot.lane.b32.xlu0 %v1002, 104
    %v1199 = vpop.permute.xlu0 %1198
    %1200 = vrot.lane.b32.xlu0 %v1007, 104
    %v1201 = vpop.permute.xlu0 %1200
    %v1203 = vsel %vm319, %v1199, 0
    %v1206 = vsel %vm319, %v1201, 0
    %1208 = vmatpush.bf16.xpose.msra.mxu0 0
    %1209 = vmatpush.bf16.xpose.msra.mxu0 0
    %1210 = vmatpush.bf16.xpose.msra.mxu0 0
    %1211 = vmatpush.bf16.xpose.msra.mxu0 0
    %1212 = vmatpush.bf16.xpose.msra.mxu0 0
    %1213 = vmatpush.bf16.xpose.msra.mxu0 0
    %1214 = vmatpush.bf16.xpose.msra.mxu0 0
    %1215 = vmatpush.bf16.xpose.msra.mxu0 %v1206
    %1216 = vmatmul.bf16.gmra.mxu0 %v1203
    %v1217 = vpop.f32.mrf.mxu0
    %v1218 = vadd.f32 0.0, %v1217
    %v1219 = vpop.f32.mrf.mxu0
    %1220 = vdwg.mxu0
    %v1221 = vsel %vm319, %v1218, -inf
    %1222 = vmax.xlane.f32.xlu0 %v1221
    %v1223 = vpop.xlane.xlu0 %1222
    %v1224 = vsub.f32 %v1218, %v1223
    %v1225 = vmul.f32 %v1224, 1.442695
    %v1226 = vpow.pop %v1225
    %v1227 = vsel %vm319, %v1226, 0.0
    %1228 = vadd.xlane.f32.xlu0 %v1227
    %v1229 = vpop.xlane.xlu0 %1228
    %v1230 = vrcp.pop %v1229
    %v1231 = vmul.f32 %v1229, %v1230
    %v1232 = vsub.f32 1.0, %v1231
    %v1233 = vmul.f32 %v1230, %v1232
    %v1234 = vadd.f32 %v1230, %v1233
    %vm1235 = vweird.f32 %v1229
    %vm1236 = vweird.f32 %v1230
    %vm1237 = vmor %vm1235, %vm1236
    %v1238 = vsel %vm1237, %v1230, %v1234
    %v1239 = vand.u32 2147483647, %v1229
    %vm1240 = vcmp.eq.f32.partialorder %v1239, 8.507059e+37
    %v1241 = vand.u32 %v1229, 2147483648
    %v1242 = vor.u32 1.1754944e-38, %v1241
    %v1243 = vsel %vm1240, %v1242, %v1238
    %v1244 = vmul.f32 %v1226, %v1243
    %v1245 = vpack.c.bf16 %v1244, %v1244
    %1246 = vrot.lane.b32.xlu0 %v1056, 104
    %v1247 = vpop.permute.xlu0 %1246
    %v1249 = vsel %vm319, %v1245, 0
    %v1252 = vsel %vm367, %v1247, 0
    %1254 = vmatpush.bf16.msra.mxu0 0
    %1255 = vmatpush.bf16.msra.mxu0 0
    %1256 = vmatpush.bf16.msra.mxu0 0
    %1257 = vmatpush.bf16.msra.mxu0 0
    %1258 = vmatpush.bf16.msra.mxu0 0
    %1259 = vmatpush.bf16.msra.mxu0 0
    %1260 = vmatpush.bf16.msra.mxu0 0
    %1261 = vmatpush.bf16.msra.mxu0 %v1252
    %1262 = vmatmul.bf16.gmra.mxu0 %v1249
    %v1263 = vpop.f32.mrf.mxu0
    %v1264 = vadd.f32 0.0, %v1263
    %v1265 = vpop.f32.mrf.mxu0
    %1266 = vdwg.mxu0
    %v1267 = vpack.c.bf16 %v1264, %v1264
    %v1269 = vsel %vm319, %v1267, 0
    %1271 = vmatpush.bf16.xpose.msra.mxu0 0
    %1272 = vmatpush.bf16.xpose.msra.mxu0 0
    %1273 = vmatpush.bf16.xpose.msra.mxu0 0
    %1274 = vmatpush.bf16.xpose.msra.mxu0 0
    %1275 = vmatpush.bf16.xpose.msra.mxu0 0
    %1276 = vmatpush.bf16.xpose.msra.mxu0 0
    %1277 = vmatpush.bf16.xpose.msra.mxu0 %v700
    %1278 = vmatpush.bf16.xpose.msra.mxu0 %v697
    %1279 = vmatmul.bf16.gmra.mxu0 %v1269
    %v1280 = vpop.f32.mrf.mxu0
    %v1281 = vadd.f32 0.0, %v1280
    %v1282 = vpop.f32.mrf.mxu0
    %1283 = vdwg.mxu0
    %v1284 = vadd.f32 %v1197, %v1281
    %v1285 = vadd.f32 %v1284, %v717
    %v1287 = vrot.slane %v1285, 1
    %v1288 = vrot.slane %v1285, 2
    %v1289 = vrot.slane %v1285, 3
    %v1290 = vrot.slane %v1285, 4
    %v1291 = vrot.slane %v1285, 5
    %v1292 = vrot.slane %v1285, 6
    %v1293 = vrot.slane %v1285, 7
    %1301 = vst.msk [vmem:[#allocation2 + $0x1] sm:$0x1] %vm735, %v1285
    %1302 = vst.msk [vmem:[#allocation2 + $0x3] sm:$0x1] %vm735, %v1287
    %1303 = vst.msk [vmem:[#allocation2 + $0x5] sm:$0x1] %vm735, %v1288
    %1304 = vst.msk [vmem:[#allocation2 + $0x7] sm:$0x1] %vm735, %v1289
    %1305 = vst.msk [vmem:[#allocation2 + $0x9] sm:$0x1] %vm735, %v1290
    %1306 = vst.msk [vmem:[#allocation2 + $0xb] sm:$0x1] %vm735, %v1291
    %1307 = vst.msk [vmem:[#allocation2 + $0xd] sm:$0x1] %vm735, %v1292
    %1308 = vst.msk [vmem:[#allocation2 + $0xf] sm:$0x1] %vm735, %v1293
    // Predicated region
    $region30: #{tpu_custom_call.1} parent=1 // pred_check
      _
    $region31: #{tpu_custom_call.1} parent=1 // pred_check_branch
      %1310 = sbr.rel (0) target = $region33
    $region32: #{tpu_custom_call.1} parent=1 // pred_region
      %1312 = vsyncadd [#allocation3], 0
      %s1313 = sshll.u32 [#allocation2], 4
      %s1314 = int_to_ptr.vmem [resolvable:$true] %s1313
      %s1315 = sshll.u32 %s7, 4
      %s1316 = int_to_ptr.hbm [resolvable:$true] %s1315
      %1321 = dma.vmem_to_hbm [thread:$0]  %s1314, 256, %s1316, [#allocation3], 32, 32, 2
    $region33: #{tpu_custom_call.1} parent=1 // pred_fallthru
      _
    // Predicated region
    $region34: #{tpu_custom_call.1} parent=1 // pred_check
      _
    $region35: #{tpu_custom_call.1} parent=1 // pred_check_branch
      %1323 = sbr.rel (0) target = $region37
    $region36: #{tpu_custom_call.1} parent=1 // pred_region
      %1325 = dma.done [#allocation3], 256
    $region37: #{tpu_custom_call.1} parent=1 // pred_fallthru
      _
    %1326 = vsyncpa [#allocation3], 1

</llo_original>
